<compile_context>
chip_gen: v7x
topology: tpu7x:2x2x1
jax: 0.10.0
libtpu: 0.0.40
codegen_flags: <defaults>
</compile_context>

<pallas_src>
import functools

import jax
import jax.numpy as jnp
import numpy as np
from jax.experimental import pallas as pl
from jax.experimental.pallas import tpu as pltpu


# --------------------------------------------------------------------------
# sizing helpers (budget-aware tiling, per-generation VMEM)
# --------------------------------------------------------------------------
def _vmem_budget():
    try:
        return int(pltpu.get_tpu_info().vmem_capacity_bytes * 0.7)
    except Exception:                       # conservative fallback (v7x-sized)
        return int((64 << 20) * 0.7)


def _halo_block_width(TD, H, W):
    """Lane width of the tiny depth-halo blocks (must be BlockSpec-legal)."""
    HW = H * W
    S = TD * HW
    if HW % 128 == 0:
        return HW
    if S % 128 == 0 and HW < 128:
        return 128
    return S                                # fallback: full tile (rare)


def _vmem_need_bytes(TD, D, H, W, Cin, Cout):
    HW = H * W
    S = TD * HW
    Bh = _halo_block_width(TD, H, W)
    elems = (Cin * (TD + 4) * HW            # depth-haloed window scratch
             + 27 * Cin * S                 # im2col patch matrix scratch
             + 2 * Cin * S                  # current tile block (double buf)
             + 4 * Cin * Bh                 # two halo blocks (double buf)
             + 2 * Cout * 27 * Cin          # weight block
             + 2 * 9 * S                    # h/w mask block
             + 2 * Cout * S                 # output block
             + 2 * 2 * Cout)                # stats block
    return elems * 4


def _pick_td(D, H, W, Cin, Cout, budget):
    """Largest depth tile that fits the VMEM budget (prefer >= 2 d-steps)."""
    HW = H * W
    legal = [td for td in range(1, D + 1)
             if D % td == 0 and ((td * HW) % 128 == 0 or td == D)]
    fits = [td for td in legal
            if _vmem_need_bytes(td, D, H, W, Cin, Cout) <= budget]
    pref = [td for td in fits if D // td >= 2]
    if pref:
        return max(pref)
    if fits:
        return max(fits)
    return min(legal)


def _hw_masks(TD, H, W, dtype):
    """(9, TD*H*W) {0,1} validity masks for the (kh, kw) shifts."""
    S = TD * H * W
    idx = np.arange(S)
    w_i = idx % W
    h_i = (idx // W) % H
    m = np.zeros((9, S), np.float32)
    for kh in range(3):
        for kw in range(3):
            hh = h_i + kh - 1
            ww = w_i + kw - 1
            m[kh * 3 + kw] = ((hh >= 0) & (hh < H) & (ww >= 0) & (ww < W))
    return jnp.asarray(m, dtype=dtype)


# --------------------------------------------------------------------------
# conv3d 3x3x3 (stride=1, pad=1, no bias) + fused per-channel BN statistics
# --------------------------------------------------------------------------
def _conv3d_kernel(xc_ref, xp_ref, xn_ref, w_ref, mask_ref, y_ref, stat_ref,
                   win_ref, p_ref, *, TD, H, W, Cin, Bh):
    # xc_ref  : (1, Cin, S)      current depth tile, S = TD*H*W (lane-dense)
    # xp_ref  : (1, Cin, Bh)     block containing the previous depth slice
    # xn_ref  : (1, Cin, Bh)     block containing the next depth slice
    # w_ref   : (Cout, 27*Cin)   flattened 3x3x3 weight
    # mask_ref: (9, S)           {0,1} h/w-validity mask per (kh, kw) tap
    # y_ref   : (1, Cout, S)     lane-dense NCDHW-flat output tile
    # stat_ref: (1, 1, Cout, 2)  per-tile (sum, shifted sum of squares)
    # win_ref : (Cin, (TD+4)*HW) depth-haloed window scratch
    # p_ref   : (27*Cin, S)      im2col patch matrix scratch
    HW = H * W
    S = TD * HW
    d = pl.program_id(1)
    nd = pl.num_programs(1)
    dt = win_ref.dtype

    # ---- assemble the depth-haloed window (static offsets only) ------------
    zpad = jnp.zeros((Cin, 2 * HW), dt)
    win_ref[:, pl.ds(0, 2 * HW)] = zpad                   # depths d0-2, d0-1
    win_ref[:, pl.ds((TD + 2) * HW, 2 * HW)] = zpad       # depths d0+TD, +TD+1
    win_ref[:, pl.ds(2 * HW, S)] = xc_ref[0]              # depths [d0, d0+TD)

    offp = (Bh - HW) % Bh

    @pl.when(d > 0)
    def _():                                              # previous depth slice
        win_ref[:, pl.ds(HW, HW)] = xp_ref[0, :, pl.ds(offp, HW)]

    @pl.when(d < nd - 1)
    def _():                                              # next depth slice
        win_ref[:, pl.ds((TD + 2) * HW, HW)] = xn_ref[0, :, pl.ds(0, HW)]

    # ---- lane-dense im2col: full-width stores, mask multiply for h/w edges --
    for kh in range(3):
        for kw in range(3):
            m = mask_ref[pl.ds(kh * 3 + kw, 1), :]        # (1, S)
            for kd in range(3):
                t = (kd * 3 + kh) * 3 + kw
                off = (kd + 1) * HW + (kh - 1) * W + (kw - 1)
                win = win_ref[:, pl.ds(off, S)]           # (Cin, S)
                val = win if (kh == 1 and kw == 1) else win * m
                p_ref[pl.ds(t * Cin, Cin), :] = val

    # ---- single MXU contraction, K = 27*Cin ---------------------------------
    acc = jax.lax.dot_general(
        w_ref[...], p_ref[...],
        dimension_numbers=(((1,), (0,)), ((), ())),
        preferred_element_type=jnp.float32)               # (Cout, S)

    y_ref[0] = acc.astype(y_ref.dtype)

    # ---- fused per-channel BN partial stats (shifted for stability) ---------
    ssum = jnp.sum(acc, axis=1, keepdims=True)            # (Cout, 1)
    mu = ssum * (1.0 / S)
    dev = acc - mu
    sdev = jnp.sum(dev * dev, axis=1, keepdims=True)      # (Cout, 1)
    stat_ref[0, 0, :, 0:1] = ssum
    stat_ref[0, 0, :, 1:2] = sdev


def _conv3d_bn_stats(x_flat, w2, hw_mask, *, D, H, W, TD, budget):
    N, Cin, L = x_flat.shape
    Cout = w2.shape[0]
    HW = H * W
    S = TD * HW
    ND = D // TD
    Bh = _halo_block_width(TD, H, W)
    kb = S // Bh                 # halo-block units per depth tile
    nb = L // Bh                 # halo-block units per batch element

    need = _vmem_need_bytes(TD, D, H, W, Cin, Cout)
    vmem_limit = int(max(32 << 20, min(need * 2, budget), need + (2 << 20)))

    kern = functools.partial(_conv3d_kernel, TD=TD, H=H, W=W, Cin=Cin, Bh=Bh)
    y, stats = pl.pallas_call(
        kern,
        out_shape=(
            jax.ShapeDtypeStruct((N, Cout, L), x_flat.dtype),
            jax.ShapeDtypeStruct((N, ND, Cout, 2), jnp.float32),
        ),
        grid=(N, ND),
        in_specs=[
            # current depth tile (fetched once per step, pipelined)
            pl.BlockSpec((1, Cin, S), lambda n, d: (n, 0, d)),
            # block containing the previous depth slice (d0 - 1)
            pl.BlockSpec((1, Cin, Bh),
                         lambda n, d: (n, 0, jnp.maximum(d * kb - 1, 0))),
            # block containing the next depth slice (d0 + TD)
            pl.BlockSpec((1, Cin, Bh),
                         lambda n, d: (n, 0, jnp.minimum((d + 1) * kb, nb - 1))),
            pl.BlockSpec((Cout, 27 * Cin), lambda n, d: (0, 0)),
            pl.BlockSpec((9, S), lambda n, d: (0, 0)),
        ],
        out_specs=(
            pl.BlockSpec((1, Cout, S), lambda n, d: (n, 0, d)),
            pl.BlockSpec((1, 1, Cout, 2), lambda n, d: (n, d, 0, 0)),
        ),
        scratch_shapes=[
            pltpu.VMEM((Cin, (TD + 4) * HW), x_flat.dtype),
            pltpu.VMEM((27 * Cin, S), x_flat.dtype),
        ],
        compiler_params=pltpu.CompilerParams(
            # no cross-step scratch carry -> both axes can shard across cores
            dimension_semantics=("parallel", "parallel"),
            vmem_limit_bytes=vmem_limit),
    )(x_flat, x_flat, x_flat, w2, hw_mask)
    return y, stats


# --------------------------------------------------------------------------
# fused BatchNorm affine + LeakyReLU on the lane-dense (N, Cout, L) layout
# --------------------------------------------------------------------------
def _bn_lrelu_kernel(y_ref, scale_ref, shift_ref, o_ref, *, neg_slope):
    z = y_ref[...] * scale_ref[...] + shift_ref[...]
    o_ref[...] = jnp.where(z >= 0, z, neg_slope * z).astype(o_ref.dtype)


def _pick_tl(L, C, target_bytes=2 << 20):
    """Largest lane tile that divides L, is 128-aligned and ~target-sized."""
    if L % 128 != 0:
        return L                              # full-extent block always legal
    cap = max(128, (target_bytes // (C * 4)) // 128 * 128)
    best = 128
    for tl in range(128, L + 1, 128):
        if L % tl == 0 and tl <= cap:
            best = tl
    return best


def _bn_lrelu(y, scale, shift, neg_slope, budget):
    # y: (N, C, L) channel-major, lane-dense (L = D*H*W)
    N, C, L = y.shape
    TL = _pick_tl(L, C)
    need = (4 * C * TL + 4 * C) * 4
    vmem_limit = int(max(16 << 20, min(need * 2, budget), need + (2 << 20)))
    kern = functools.partial(_bn_lrelu_kernel, neg_slope=neg_slope)
    return pl.pallas_call(
        kern,
        out_shape=jax.ShapeDtypeStruct((N, C, L), y.dtype),
        grid=(N, L // TL),
        in_specs=[
            pl.BlockSpec((1, C, TL), lambda n, b: (n, 0, b)),
            pl.BlockSpec((C, 1), lambda n, b: (0, 0)),
            pl.BlockSpec((C, 1), lambda n, b: (0, 0)),
        ],
        out_specs=pl.BlockSpec((1, C, TL), lambda n, b: (n, 0, b)),
        # write the activation in place over the conv output
        input_output_aliases={0: 0},
        compiler_params=pltpu.CompilerParams(
            dimension_semantics=("parallel", "parallel"),
            vmem_limit_bytes=vmem_limit),
    )(y, scale.reshape(C, 1), shift.reshape(C, 1))


# ------------------------------- wrapper ------------------------------------
def conv3d3x3_block(x_ncdhw, weight_oidhw, gamma, beta,
                    *, lrelu_eps=0.2, bn_eps=1e-5):
    """Forward of Conv3D3x3(c_in, c_out, stride=1, use_bn=True, use_up=False)."""
    N, Cin, D, H, W = x_ncdhw.shape
    Cout = weight_oidhw.shape[0]
    if H * W < W + 1:                         # the flat-shift trick needs H >= 2
        raise NotImplementedError("Conv3D3x3 Pallas kernel requires H >= 2")
    HW, L = H * W, D * H * W

    budget = _vmem_budget()
    TD = _pick_td(D, H, W, Cin, Cout, budget)

    # x stays NCDHW: flattening the spatial dims is a free (metadata) reshape.
    x_flat = x_ncdhw.reshape(N, Cin, L)
    # One dense (Cout, 27*Cin) weight tile, column order (kd, kh, kw, ci).
    w2 = jnp.transpose(weight_oidhw, (0, 2, 3, 4, 1)).reshape(Cout, 27 * Cin)
    hw_mask = _hw_masks(TD, H, W, x_ncdhw.dtype)

    y, stats = _conv3d_bn_stats(x_flat, w2, hw_mask, D=D, H=H, W=W, TD=TD,
                                budget=budget)             # y: (N, Cout, L)

    # BatchNorm3d training-mode batch statistics from the fused per-tile
    # (sum, shifted-sum-of-squares): numerically stable parallel combine.
    tile_cnt = TD * HW
    cnt = N * L
    sums = stats[..., 0]                                   # (N, ND, Cout)
    sdevs = stats[..., 1]
    mean = jnp.sum(sums, axis=(0, 1)) / cnt                # (Cout,)
    mu_t = sums * (1.0 / tile_cnt)
    var = (jnp.sum(sdevs, axis=(0, 1))
           + tile_cnt * jnp.sum(jnp.square(mu_t - mean), axis=(0, 1))) / cnt
    var = jnp.maximum(var, 0.0)                            # biased variance
    scale = gamma * jax.lax.rsqrt(var + bn_eps)
    shift = beta - mean * scale

    out = _bn_lrelu(y, scale, shift, lrelu_eps, budget)    # (N, Cout, L)
    return out.reshape(N, Cout, D, H, W)


# ----------------------------- pure-JAX reference ---------------------------
def _reference(x_ncdhw, weight_oidhw, gamma, beta, lrelu_eps=0.2, bn_eps=1e-5):
    y = jax.lax.conv_general_dilated(
        x_ncdhw, weight_oidhw,
        window_strides=(1, 1, 1),
        padding=((1, 1), (1, 1), (1, 1)),
        dimension_numbers=("NCDHW", "OIDHW", "NCDHW"),
    )
    mean = jnp.mean(y, axis=(0, 2, 3, 4), keepdims=True)
    var = jnp.mean(jnp.square(y - mean), axis=(0, 2, 3, 4), keepdims=True)
    yn = (y - mean) / jnp.sqrt(var + bn_eps)
    yn = yn * gamma[None, :, None, None, None] + beta[None, :, None, None, None]
    return jnp.where(yn >= 0, yn, lrelu_eps * yn)


if __name__ == "__main__":
    key = jax.random.PRNGKey(0)
    kx, kw = jax.random.split(key)

    N, Cin, Cout, D, H, W = 2, 4, 8, 8, 8, 8
    x = jax.random.normal(kx, (N, Cin, D, H, W), jnp.float32)

    # Deterministic Conv3d weight init (kaiming_uniform-style bound), no bias.
    fan_in = Cin * 3 * 3 * 3
    bound = 1.0 / (fan_in ** 0.5)
    weight = jax.random.uniform(kw, (Cout, Cin, 3, 3, 3), jnp.float32,
                                minval=-bound, maxval=bound)
    # BatchNorm3d default parameters.
    gamma = jnp.ones((Cout,), jnp.float32)
    beta = jnp.zeros((Cout,), jnp.float32)

    fwd = jax.jit(conv3d3x3_block)
    out = fwd(x, weight, gamma, beta)
    out = jax.block_until_ready(out)

    ref = _reference(x, weight, gamma, beta, lrelu_eps=0.2)
    assert out.shape == (N, Cout, D, H, W), out.shape
    assert jnp.allclose(out, ref, atol=2e-4, rtol=2e-4), \
        float(jnp.max(jnp.abs(out - ref)))

    print("KERNEL_OK")
</pallas_src>

<mosaic_0001>
module attributes {stable_mosaic.version = 11 : i64} {
  func.func @_conv3d_kernel(%arg0: i32, %arg1: i32, %arg2: memref<1x4x256xf32, #tpu.memory_space<vmem>>, %arg3: memref<1x4x128xf32, #tpu.memory_space<vmem>>, %arg4: memref<1x4x128xf32, #tpu.memory_space<vmem>>, %arg5: memref<8x108xf32, #tpu.memory_space<vmem>>, %arg6: memref<9x256xf32, #tpu.memory_space<vmem>>, %arg7: memref<1x8x256xf32, #tpu.memory_space<vmem>>, %arg8: memref<1x1x8x2xf32, #tpu.memory_space<vmem>>, %arg9: memref<4x512xf32, #tpu.memory_space<vmem>>, %arg10: memref<108x256xf32, #tpu.memory_space<vmem>>) attributes {dimension_semantics = [#tpu.dimension_semantics<parallel>, #tpu.dimension_semantics<parallel>], iteration_bounds = array<i64: 2, 2>, scalar_prefetch = 0 : i64, scratch_operands = 2 : i64, tpu.core_type = #tpu.core_type<tc>, window_params = [{transform_indices = @transform_0, window_bounds = array<i64: 1, 4, 256>}, {transform_indices = @transform_1, window_bounds = array<i64: 1, 4, 128>}, {transform_indices = @transform_2, window_bounds = array<i64: 1, 4, 128>}, {pipeline_mode = #tpu.pipeline_mode<synchronous>, transform_indices = @transform_3, window_bounds = array<i64: 8, 108>}, {pipeline_mode = #tpu.pipeline_mode<synchronous>, transform_indices = @transform_4, window_bounds = array<i64: 9, 256>}, {transform_indices = @transform_5, window_bounds = array<i64: 1, 8, 256>}, {transform_indices = @transform_6, window_bounds = array<i64: 1, 1, 8, 2>}]} {
    %cst = arith.constant 0.000000e+00 : f32
    %0 = vector.broadcast %cst : f32 to vector<4x128xf32>
    %c0 = arith.constant 0 : index
    %c0_0 = arith.constant 0 : index
    %1 = vector.load %arg9[%c0, %c0_0] : memref<4x512xf32, #tpu.memory_space<vmem>>, vector<4x128xf32>
    tpu.vector_store %arg9[%c0, %c0_0], %0 {strides = array<i32>} : memref<4x512xf32, #tpu.memory_space<vmem>>, vector<4x128xf32>,
    %c0_1 = arith.constant 0 : index
    %c384 = arith.constant 384 : index
    %2 = vector.load %arg9[%c0_1, %c384] : memref<4x512xf32, #tpu.memory_space<vmem>>, vector<4x128xf32>
    tpu.vector_store %arg9[%c0_1, %c384], %0 {strides = array<i32>} : memref<4x512xf32, #tpu.memory_space<vmem>>, vector<4x128xf32>,
    %c0_2 = arith.constant 0 : index
    %c0_3 = arith.constant 0 : index
    %c0_4 = arith.constant 0 : index
    %3 = vector.load %arg2[%c0_2, %c0_3, %c0_4] : memref<1x4x256xf32, #tpu.memory_space<vmem>>, vector<1x4x256xf32>
    %4 = vector.shape_cast %3 : vector<1x4x256xf32> to vector<4x256xf32>
    %c0_5 = arith.constant 0 : index
    %c128 = arith.constant 128 : index
    %5 = vector.load %arg9[%c0_5, %c128] : memref<4x512xf32, #tpu.memory_space<vmem>>, vector<4x256xf32>
    tpu.vector_store %arg9[%c0_5, %c128], %4 {strides = array<i32>} : memref<4x512xf32, #tpu.memory_space<vmem>>, vector<4x256xf32>,
    %c0_i32 = arith.constant 0 : i32
    %6 = arith.cmpi sgt, %arg1, %c0_i32 : i32
    %7 = arith.extui %6 : i1 to i32
    %c0_i32_6 = arith.constant 0 : i32
    %8 = arith.cmpi ne, %7, %c0_i32_6 : i32
    scf.if %8 {
      %c0_96 = arith.constant 0 : index
      %c0_97 = arith.constant 0 : index
      %c64_98 = arith.constant 64 : index
      %143 = vector.load %arg3[%c0_96, %c0_97, %c64_98] : memref<1x4x128xf32, #tpu.memory_space<vmem>>, vector<1x4x64xf32>
      %144 = vector.shape_cast %143 : vector<1x4x64xf32> to vector<4x64xf32>
      %c0_99 = arith.constant 0 : index
      %c64_100 = arith.constant 64 : index
      %145 = vector.load %arg9[%c0_99, %c64_100] : memref<4x512xf32, #tpu.memory_space<vmem>>, vector<4x64xf32>
      tpu.vector_store %arg9[%c0_99, %c64_100], %144 {strides = array<i32>} : memref<4x512xf32, #tpu.memory_space<vmem>>, vector<4x64xf32>,
    } else {
    }
    %c1_i32 = arith.constant 1 : i32
    %9 = arith.cmpi slt, %arg1, %c1_i32 : i32
    %10 = arith.extui %9 : i1 to i32
    %c0_i32_7 = arith.constant 0 : i32
    %11 = arith.cmpi ne, %10, %c0_i32_7 : i32
    scf.if %11 {
      %c0_96 = arith.constant 0 : index
      %c0_97 = arith.constant 0 : index
      %c0_98 = arith.constant 0 : index
      %143 = vector.load %arg4[%c0_96, %c0_97, %c0_98] : memref<1x4x128xf32, #tpu.memory_space<vmem>>, vector<1x4x64xf32>
      %144 = vector.shape_cast %143 : vector<1x4x64xf32> to vector<4x64xf32>
      %c0_99 = arith.constant 0 : index
      %c384_100 = arith.constant 384 : index
      %145 = vector.load %arg9[%c0_99, %c384_100] : memref<4x512xf32, #tpu.memory_space<vmem>>, vector<4x64xf32>
      tpu.vector_store %arg9[%c0_99, %c384_100], %144 {strides = array<i32>} : memref<4x512xf32, #tpu.memory_space<vmem>>, vector<4x64xf32>,
    } else {
    }
    %c0_8 = arith.constant 0 : index
    %c0_9 = arith.constant 0 : index
    %12 = vector.load %arg6[%c0_8, %c0_9] : memref<9x256xf32, #tpu.memory_space<vmem>>, vector<1x256xf32>
    %c0_10 = arith.constant 0 : index
    %c55 = arith.constant 55 : index
    %13 = vector.load %arg9[%c0_10, %c55] : memref<4x512xf32, #tpu.memory_space<vmem>>, vector<4x256xf32>
    %14 = vector.broadcast %12 : vector<1x256xf32> to vector<4x256xf32>
    %15 = arith.mulf %13, %14 : vector<4x256xf32>
    %c0_11 = arith.constant 0 : index
    %c0_12 = arith.constant 0 : index
    %16 = vector.load %arg10[%c0_11, %c0_12] : memref<108x256xf32, #tpu.memory_space<vmem>>, vector<4x256xf32>
    tpu.vector_store %arg10[%c0_11, %c0_12], %15 {strides = array<i32>} : memref<108x256xf32, #tpu.memory_space<vmem>>, vector<4x256xf32>,
    %c0_13 = arith.constant 0 : index
    %c119 = arith.constant 119 : index
    %17 = vector.load %arg9[%c0_13, %c119] : memref<4x512xf32, #tpu.memory_space<vmem>>, vector<4x256xf32>
    %18 = vector.broadcast %12 : vector<1x256xf32> to vector<4x256xf32>
    %19 = arith.mulf %17, %18 : vector<4x256xf32>
    %c36 = arith.constant 36 : index
    %c0_14 = arith.constant 0 : index
    %20 = vector.load %arg10[%c36, %c0_14] : memref<108x256xf32, #tpu.memory_space<vmem>>, vector<4x256xf32>
    tpu.vector_store %arg10[%c36, %c0_14], %19 {strides = array<i32>} : memref<108x256xf32, #tpu.memory_space<vmem>>, vector<4x256xf32>,
    %c0_15 = arith.constant 0 : index
    %c183 = arith.constant 183 : index
    %21 = vector.load %arg9[%c0_15, %c183] : memref<4x512xf32, #tpu.memory_space<vmem>>, vector<4x256xf32>
    %22 = vector.broadcast %12 : vector<1x256xf32> to vector<4x256xf32>
    %23 = arith.mulf %21, %22 : vector<4x256xf32>
    %c72 = arith.constant 72 : index
    %c0_16 = arith.constant 0 : index
    %24 = vector.load %arg10[%c72, %c0_16] : memref<108x256xf32, #tpu.memory_space<vmem>>, vector<4x256xf32>
    tpu.vector_store %arg10[%c72, %c0_16], %23 {strides = array<i32>} : memref<108x256xf32, #tpu.memory_space<vmem>>, vector<4x256xf32>,
    %c1 = arith.constant 1 : index
    %c0_17 = arith.constant 0 : index
    %25 = vector.load %arg6[%c1, %c0_17] : memref<9x256xf32, #tpu.memory_space<vmem>>, vector<1x256xf32>
    %c0_18 = arith.constant 0 : index
    %c56 = arith.constant 56 : index
    %26 = vector.load %arg9[%c0_18, %c56] : memref<4x512xf32, #tpu.memory_space<vmem>>, vector<4x256xf32>
    %27 = vector.broadcast %25 : vector<1x256xf32> to vector<4x256xf32>
    %28 = arith.mulf %26, %27 : vector<4x256xf32>
    %c4 = arith.constant 4 : index
    %c0_19 = arith.constant 0 : index
    %29 = vector.load %arg10[%c4, %c0_19] : memref<108x256xf32, #tpu.memory_space<vmem>>, vector<4x256xf32>
    tpu.vector_store %arg10[%c4, %c0_19], %28 {strides = array<i32>} : memref<108x256xf32, #tpu.memory_space<vmem>>, vector<4x256xf32>,
    %c0_20 = arith.constant 0 : index
    %c120 = arith.constant 120 : index
    %30 = vector.load %arg9[%c0_20, %c120] : memref<4x512xf32, #tpu.memory_space<vmem>>, vector<4x256xf32>
    %31 = vector.broadcast %25 : vector<1x256xf32> to vector<4x256xf32>
    %32 = arith.mulf %30, %31 : vector<4x256xf32>
    %c40 = arith.constant 40 : index
    %c0_21 = arith.constant 0 : index
    %33 = vector.load %arg10[%c40, %c0_21] : memref<108x256xf32, #tpu.memory_space<vmem>>, vector<4x256xf32>
    tpu.vector_store %arg10[%c40, %c0_21], %32 {strides = array<i32>} : memref<108x256xf32, #tpu.memory_space<vmem>>, vector<4x256xf32>,
    %c0_22 = arith.constant 0 : index
    %c184 = arith.constant 184 : index
    %34 = vector.load %arg9[%c0_22, %c184] : memref<4x512xf32, #tpu.memory_space<vmem>>, vector<4x256xf32>
    %35 = vector.broadcast %25 : vector<1x256xf32> to vector<4x256xf32>
    %36 = arith.mulf %34, %35 : vector<4x256xf32>
    %c76 = arith.constant 76 : index
    %c0_23 = arith.constant 0 : index
    %37 = vector.load %arg10[%c76, %c0_23] : memref<108x256xf32, #tpu.memory_space<vmem>>, vector<4x256xf32>
    tpu.vector_store %arg10[%c76, %c0_23], %36 {strides = array<i32>} : memref<108x256xf32, #tpu.memory_space<vmem>>, vector<4x256xf32>,
    %c2 = arith.constant 2 : index
    %c0_24 = arith.constant 0 : index
    %38 = vector.load %arg6[%c2, %c0_24] : memref<9x256xf32, #tpu.memory_space<vmem>>, vector<1x256xf32>
    %c0_25 = arith.constant 0 : index
    %c57 = arith.constant 57 : index
    %39 = vector.load %arg9[%c0_25, %c57] : memref<4x512xf32, #tpu.memory_space<vmem>>, vector<4x256xf32>
    %40 = vector.broadcast %38 : vector<1x256xf32> to vector<4x256xf32>
    %41 = arith.mulf %39, %40 : vector<4x256xf32>
    %c8 = arith.constant 8 : index
    %c0_26 = arith.constant 0 : index
    %42 = vector.load %arg10[%c8, %c0_26] : memref<108x256xf32, #tpu.memory_space<vmem>>, vector<4x256xf32>
    tpu.vector_store %arg10[%c8, %c0_26], %41 {strides = array<i32>} : memref<108x256xf32, #tpu.memory_space<vmem>>, vector<4x256xf32>,
    %c0_27 = arith.constant 0 : index
    %c121 = arith.constant 121 : index
    %43 = vector.load %arg9[%c0_27, %c121] : memref<4x512xf32, #tpu.memory_space<vmem>>, vector<4x256xf32>
    %44 = vector.broadcast %38 : vector<1x256xf32> to vector<4x256xf32>
    %45 = arith.mulf %43, %44 : vector<4x256xf32>
    %c44 = arith.constant 44 : index
    %c0_28 = arith.constant 0 : index
    %46 = vector.load %arg10[%c44, %c0_28] : memref<108x256xf32, #tpu.memory_space<vmem>>, vector<4x256xf32>
    tpu.vector_store %arg10[%c44, %c0_28], %45 {strides = array<i32>} : memref<108x256xf32, #tpu.memory_space<vmem>>, vector<4x256xf32>,
    %c0_29 = arith.constant 0 : index
    %c185 = arith.constant 185 : index
    %47 = vector.load %arg9[%c0_29, %c185] : memref<4x512xf32, #tpu.memory_space<vmem>>, vector<4x256xf32>
    %48 = vector.broadcast %38 : vector<1x256xf32> to vector<4x256xf32>
    %49 = arith.mulf %47, %48 : vector<4x256xf32>
    %c80 = arith.constant 80 : index
    %c0_30 = arith.constant 0 : index
    %50 = vector.load %arg10[%c80, %c0_30] : memref<108x256xf32, #tpu.memory_space<vmem>>, vector<4x256xf32>
    tpu.vector_store %arg10[%c80, %c0_30], %49 {strides = array<i32>} : memref<108x256xf32, #tpu.memory_space<vmem>>, vector<4x256xf32>,
    %c3 = arith.constant 3 : index
    %c0_31 = arith.constant 0 : index
    %51 = vector.load %arg6[%c3, %c0_31] : memref<9x256xf32, #tpu.memory_space<vmem>>, vector<1x256xf32>
    %c0_32 = arith.constant 0 : index
    %c63 = arith.constant 63 : index
    %52 = vector.load %arg9[%c0_32, %c63] : memref<4x512xf32, #tpu.memory_space<vmem>>, vector<4x256xf32>
    %53 = vector.broadcast %51 : vector<1x256xf32> to vector<4x256xf32>
    %54 = arith.mulf %52, %53 : vector<4x256xf32>
    %c12 = arith.constant 12 : index
    %c0_33 = arith.constant 0 : index
    %55 = vector.load %arg10[%c12, %c0_33] : memref<108x256xf32, #tpu.memory_space<vmem>>, vector<4x256xf32>
    tpu.vector_store %arg10[%c12, %c0_33], %54 {strides = array<i32>} : memref<108x256xf32, #tpu.memory_space<vmem>>, vector<4x256xf32>,
    %c0_34 = arith.constant 0 : index
    %c127 = arith.constant 127 : index
    %56 = vector.load %arg9[%c0_34, %c127] : memref<4x512xf32, #tpu.memory_space<vmem>>, vector<4x256xf32>
    %57 = vector.broadcast %51 : vector<1x256xf32> to vector<4x256xf32>
    %58 = arith.mulf %56, %57 : vector<4x256xf32>
    %c48 = arith.constant 48 : index
    %c0_35 = arith.constant 0 : index
    %59 = vector.load %arg10[%c48, %c0_35] : memref<108x256xf32, #tpu.memory_space<vmem>>, vector<4x256xf32>
    tpu.vector_store %arg10[%c48, %c0_35], %58 {strides = array<i32>} : memref<108x256xf32, #tpu.memory_space<vmem>>, vector<4x256xf32>,
    %c0_36 = arith.constant 0 : index
    %c191 = arith.constant 191 : index
    %60 = vector.load %arg9[%c0_36, %c191] : memref<4x512xf32, #tpu.memory_space<vmem>>, vector<4x256xf32>
    %61 = vector.broadcast %51 : vector<1x256xf32> to vector<4x256xf32>
    %62 = arith.mulf %60, %61 : vector<4x256xf32>
    %c84 = arith.constant 84 : index
    %c0_37 = arith.constant 0 : index
    %63 = vector.load %arg10[%c84, %c0_37] : memref<108x256xf32, #tpu.memory_space<vmem>>, vector<4x256xf32>
    tpu.vector_store %arg10[%c84, %c0_37], %62 {strides = array<i32>} : memref<108x256xf32, #tpu.memory_space<vmem>>, vector<4x256xf32>,
    %c0_38 = arith.constant 0 : index
    %c64 = arith.constant 64 : index
    %64 = vector.load %arg9[%c0_38, %c64] : memref<4x512xf32, #tpu.memory_space<vmem>>, vector<4x256xf32>
    %c16 = arith.constant 16 : index
    %c0_39 = arith.constant 0 : index
    %65 = vector.load %arg10[%c16, %c0_39] : memref<108x256xf32, #tpu.memory_space<vmem>>, vector<4x256xf32>
    tpu.vector_store %arg10[%c16, %c0_39], %64 {strides = array<i32>} : memref<108x256xf32, #tpu.memory_space<vmem>>, vector<4x256xf32>,
    %c0_40 = arith.constant 0 : index
    %c128_41 = arith.constant 128 : index
    %66 = vector.load %arg9[%c0_40, %c128_41] : memref<4x512xf32, #tpu.memory_space<vmem>>, vector<4x256xf32>
    %c52 = arith.constant 52 : index
    %c0_42 = arith.constant 0 : index
    %67 = vector.load %arg10[%c52, %c0_42] : memref<108x256xf32, #tpu.memory_space<vmem>>, vector<4x256xf32>
    tpu.vector_store %arg10[%c52, %c0_42], %66 {strides = array<i32>} : memref<108x256xf32, #tpu.memory_space<vmem>>, vector<4x256xf32>,
    %c0_43 = arith.constant 0 : index
    %c192 = arith.constant 192 : index
    %68 = vector.load %arg9[%c0_43, %c192] : memref<4x512xf32, #tpu.memory_space<vmem>>, vector<4x256xf32>
    %c88 = arith.constant 88 : index
    %c0_44 = arith.constant 0 : index
    %69 = vector.load %arg10[%c88, %c0_44] : memref<108x256xf32, #tpu.memory_space<vmem>>, vector<4x256xf32>
    tpu.vector_store %arg10[%c88, %c0_44], %68 {strides = array<i32>} : memref<108x256xf32, #tpu.memory_space<vmem>>, vector<4x256xf32>,
    %c5 = arith.constant 5 : index
    %c0_45 = arith.constant 0 : index
    %70 = vector.load %arg6[%c5, %c0_45] : memref<9x256xf32, #tpu.memory_space<vmem>>, vector<1x256xf32>
    %c0_46 = arith.constant 0 : index
    %c65 = arith.constant 65 : index
    %71 = vector.load %arg9[%c0_46, %c65] : memref<4x512xf32, #tpu.memory_space<vmem>>, vector<4x256xf32>
    %72 = vector.broadcast %70 : vector<1x256xf32> to vector<4x256xf32>
    %73 = arith.mulf %71, %72 : vector<4x256xf32>
    %c20 = arith.constant 20 : index
    %c0_47 = arith.constant 0 : index
    %74 = vector.load %arg10[%c20, %c0_47] : memref<108x256xf32, #tpu.memory_space<vmem>>, vector<4x256xf32>
    tpu.vector_store %arg10[%c20, %c0_47], %73 {strides = array<i32>} : memref<108x256xf32, #tpu.memory_space<vmem>>, vector<4x256xf32>,
    %c0_48 = arith.constant 0 : index
    %c129 = arith.constant 129 : index
    %75 = vector.load %arg9[%c0_48, %c129] : memref<4x512xf32, #tpu.memory_space<vmem>>, vector<4x256xf32>
    %76 = vector.broadcast %70 : vector<1x256xf32> to vector<4x256xf32>
    %77 = arith.mulf %75, %76 : vector<4x256xf32>
    %c56_49 = arith.constant 56 : index
    %c0_50 = arith.constant 0 : index
    %78 = vector.load %arg10[%c56_49, %c0_50] : memref<108x256xf32, #tpu.memory_space<vmem>>, vector<4x256xf32>
    tpu.vector_store %arg10[%c56_49, %c0_50], %77 {strides = array<i32>} : memref<108x256xf32, #tpu.memory_space<vmem>>, vector<4x256xf32>,
    %c0_51 = arith.constant 0 : index
    %c193 = arith.constant 193 : index
    %79 = vector.load %arg9[%c0_51, %c193] : memref<4x512xf32, #tpu.memory_space<vmem>>, vector<4x256xf32>
    %80 = vector.broadcast %70 : vector<1x256xf32> to vector<4x256xf32>
    %81 = arith.mulf %79, %80 : vector<4x256xf32>
    %c92 = arith.constant 92 : index
    %c0_52 = arith.constant 0 : index
    %82 = vector.load %arg10[%c92, %c0_52] : memref<108x256xf32, #tpu.memory_space<vmem>>, vector<4x256xf32>
    tpu.vector_store %arg10[%c92, %c0_52], %81 {strides = array<i32>} : memref<108x256xf32, #tpu.memory_space<vmem>>, vector<4x256xf32>,
    %c6 = arith.constant 6 : index
    %c0_53 = arith.constant 0 : index
    %83 = vector.load %arg6[%c6, %c0_53] : memref<9x256xf32, #tpu.memory_space<vmem>>, vector<1x256xf32>
    %c0_54 = arith.constant 0 : index
    %c71 = arith.constant 71 : index
    %84 = vector.load %arg9[%c0_54, %c71] : memref<4x512xf32, #tpu.memory_space<vmem>>, vector<4x256xf32>
    %85 = vector.broadcast %83 : vector<1x256xf32> to vector<4x256xf32>
    %86 = arith.mulf %84, %85 : vector<4x256xf32>
    %c24 = arith.constant 24 : index
    %c0_55 = arith.constant 0 : index
    %87 = vector.load %arg10[%c24, %c0_55] : memref<108x256xf32, #tpu.memory_space<vmem>>, vector<4x256xf32>
    tpu.vector_store %arg10[%c24, %c0_55], %86 {strides = array<i32>} : memref<108x256xf32, #tpu.memory_space<vmem>>, vector<4x256xf32>,
    %c0_56 = arith.constant 0 : index
    %c135 = arith.constant 135 : index
    %88 = vector.load %arg9[%c0_56, %c135] : memref<4x512xf32, #tpu.memory_space<vmem>>, vector<4x256xf32>
    %89 = vector.broadcast %83 : vector<1x256xf32> to vector<4x256xf32>
    %90 = arith.mulf %88, %89 : vector<4x256xf32>
    %c60 = arith.constant 60 : index
    %c0_57 = arith.constant 0 : index
    %91 = vector.load %arg10[%c60, %c0_57] : memref<108x256xf32, #tpu.memory_space<vmem>>, vector<4x256xf32>
    tpu.vector_store %arg10[%c60, %c0_57], %90 {strides = array<i32>} : memref<108x256xf32, #tpu.memory_space<vmem>>, vector<4x256xf32>,
    %c0_58 = arith.constant 0 : index
    %c199 = arith.constant 199 : index
    %92 = vector.load %arg9[%c0_58, %c199] : memref<4x512xf32, #tpu.memory_space<vmem>>, vector<4x256xf32>
    %93 = vector.broadcast %83 : vector<1x256xf32> to vector<4x256xf32>
    %94 = arith.mulf %92, %93 : vector<4x256xf32>
    %c96 = arith.constant 96 : index
    %c0_59 = arith.constant 0 : index
    %95 = vector.load %arg10[%c96, %c0_59] : memref<108x256xf32, #tpu.memory_space<vmem>>, vector<4x256xf32>
    tpu.vector_store %arg10[%c96, %c0_59], %94 {strides = array<i32>} : memref<108x256xf32, #tpu.memory_space<vmem>>, vector<4x256xf32>,
    %c7 = arith.constant 7 : index
    %c0_60 = arith.constant 0 : index
    %96 = vector.load %arg6[%c7, %c0_60] : memref<9x256xf32, #tpu.memory_space<vmem>>, vector<1x256xf32>
    %c0_61 = arith.constant 0 : index
    %c72_62 = arith.constant 72 : index
    %97 = vector.load %arg9[%c0_61, %c72_62] : memref<4x512xf32, #tpu.memory_space<vmem>>, vector<4x256xf32>
    %98 = vector.broadcast %96 : vector<1x256xf32> to vector<4x256xf32>
    %99 = arith.mulf %97, %98 : vector<4x256xf32>
    %c28 = arith.constant 28 : index
    %c0_63 = arith.constant 0 : index
    %100 = vector.load %arg10[%c28, %c0_63] : memref<108x256xf32, #tpu.memory_space<vmem>>, vector<4x256xf32>
    tpu.vector_store %arg10[%c28, %c0_63], %99 {strides = array<i32>} : memref<108x256xf32, #tpu.memory_space<vmem>>, vector<4x256xf32>,
    %c0_64 = arith.constant 0 : index
    %c136 = arith.constant 136 : index
    %101 = vector.load %arg9[%c0_64, %c136] : memref<4x512xf32, #tpu.memory_space<vmem>>, vector<4x256xf32>
    %102 = vector.broadcast %96 : vector<1x256xf32> to vector<4x256xf32>
    %103 = arith.mulf %101, %102 : vector<4x256xf32>
    %c64_65 = arith.constant 64 : index
    %c0_66 = arith.constant 0 : index
    %104 = vector.load %arg10[%c64_65, %c0_66] : memref<108x256xf32, #tpu.memory_space<vmem>>, vector<4x256xf32>
    tpu.vector_store %arg10[%c64_65, %c0_66], %103 {strides = array<i32>} : memref<108x256xf32, #tpu.memory_space<vmem>>, vector<4x256xf32>,
    %c0_67 = arith.constant 0 : index
    %c200 = arith.constant 200 : index
    %105 = vector.load %arg9[%c0_67, %c200] : memref<4x512xf32, #tpu.memory_space<vmem>>, vector<4x256xf32>
    %106 = vector.broadcast %96 : vector<1x256xf32> to vector<4x256xf32>
    %107 = arith.mulf %105, %106 : vector<4x256xf32>
    %c100 = arith.constant 100 : index
    %c0_68 = arith.constant 0 : index
    %108 = vector.load %arg10[%c100, %c0_68] : memref<108x256xf32, #tpu.memory_space<vmem>>, vector<4x256xf32>
    tpu.vector_store %arg10[%c100, %c0_68], %107 {strides = array<i32>} : memref<108x256xf32, #tpu.memory_space<vmem>>, vector<4x256xf32>,
    %c8_69 = arith.constant 8 : index
    %c0_70 = arith.constant 0 : index
    %109 = vector.load %arg6[%c8_69, %c0_70] : memref<9x256xf32, #tpu.memory_space<vmem>>, vector<1x256xf32>
    %c0_71 = arith.constant 0 : index
    %c73 = arith.constant 73 : index
    %110 = vector.load %arg9[%c0_71, %c73] : memref<4x512xf32, #tpu.memory_space<vmem>>, vector<4x256xf32>
    %111 = vector.broadcast %109 : vector<1x256xf32> to vector<4x256xf32>
    %112 = arith.mulf %110, %111 : vector<4x256xf32>
    %c32 = arith.constant 32 : index
    %c0_72 = arith.constant 0 : index
    %113 = vector.load %arg10[%c32, %c0_72] : memref<108x256xf32, #tpu.memory_space<vmem>>, vector<4x256xf32>
    tpu.vector_store %arg10[%c32, %c0_72], %112 {strides = array<i32>} : memref<108x256xf32, #tpu.memory_space<vmem>>, vector<4x256xf32>,
    %c0_73 = arith.constant 0 : index
    %c137 = arith.constant 137 : index
    %114 = vector.load %arg9[%c0_73, %c137] : memref<4x512xf32, #tpu.memory_space<vmem>>, vector<4x256xf32>
    %115 = vector.broadcast %109 : vector<1x256xf32> to vector<4x256xf32>
    %116 = arith.mulf %114, %115 : vector<4x256xf32>
    %c68 = arith.constant 68 : index
    %c0_74 = arith.constant 0 : index
    %117 = vector.load %arg10[%c68, %c0_74] : memref<108x256xf32, #tpu.memory_space<vmem>>, vector<4x256xf32>
    tpu.vector_store %arg10[%c68, %c0_74], %116 {strides = array<i32>} : memref<108x256xf32, #tpu.memory_space<vmem>>, vector<4x256xf32>,
    %c0_75 = arith.constant 0 : index
    %c201 = arith.constant 201 : index
    %118 = vector.load %arg9[%c0_75, %c201] : memref<4x512xf32, #tpu.memory_space<vmem>>, vector<4x256xf32>
    %119 = vector.broadcast %109 : vector<1x256xf32> to vector<4x256xf32>
    %120 = arith.mulf %118, %119 : vector<4x256xf32>
    %c104 = arith.constant 104 : index
    %c0_76 = arith.constant 0 : index
    %121 = vector.load %arg10[%c104, %c0_76] : memref<108x256xf32, #tpu.memory_space<vmem>>, vector<4x256xf32>
    tpu.vector_store %arg10[%c104, %c0_76], %120 {strides = array<i32>} : memref<108x256xf32, #tpu.memory_space<vmem>>, vector<4x256xf32>,
    %c0_77 = arith.constant 0 : index
    %c0_78 = arith.constant 0 : index
    %122 = vector.load %arg5[%c0_77, %c0_78] : memref<8x108xf32, #tpu.memory_space<vmem>>, vector<8x108xf32>
    %c0_79 = arith.constant 0 : index
    %c0_80 = arith.constant 0 : index
    %123 = vector.load %arg10[%c0_79, %c0_80] : memref<108x256xf32, #tpu.memory_space<vmem>>, vector<108x256xf32>
    %cst_81 = arith.constant dense<0.000000e+00> : vector<8x256xf32>
    %124 = tpu.matmul %122, %123, %cst_81 {dimension_numbers = #tpu.dot_dimension_numbers<[1], [0], [0], [1], [0, 0, 1, 1], [], []>} : vector<8x108xf32>, vector<108x256xf32>, vector<8x256xf32> -> vector<8x256xf32>
    %c0_82 = arith.constant 0 : index
    %c0_83 = arith.constant 0 : index
    %c0_84 = arith.constant 0 : index
    %125 = vector.load %arg7[%c0_82, %c0_83, %c0_84] : memref<1x8x256xf32, #tpu.memory_space<vmem>>, vector<1x8x256xf32>
    %126 = vector.shape_cast %125 : vector<1x8x256xf32> to vector<8x256xf32>
    %127 = vector.shape_cast %124 : vector<8x256xf32> to vector<1x8x256xf32>
    tpu.vector_store %arg7[%c0_82, %c0_83, %c0_84], %127 {strides = array<i32>} : memref<1x8x256xf32, #tpu.memory_space<vmem>>, vector<1x8x256xf32>,
    %cst_85 = arith.constant dense<0.000000e+00> : vector<8xf32>
    %128 = vector.multi_reduction <add>, %124, %cst_85 [1] : vector<8x256xf32> to vector<8xf32>
    %129 = vector.shape_cast %128 : vector<8xf32> to vector<8x1xf32>
    %cst_86 = arith.constant 3.906250e-03 : f32
    %130 = vector.broadcast %cst_86 : f32 to vector<8x1xf32>
    %131 = arith.mulf %129, %130 : vector<8x1xf32>
    %132 = vector.broadcast %131 : vector<8x1xf32> to vector<8x256xf32>
    %133 = arith.subf %124, %132 : vector<8x256xf32>
    %134 = arith.mulf %133, %133 : vector<8x256xf32>
    %cst_87 = arith.constant dense<0.000000e+00> : vector<8xf32>
    %135 = vector.multi_reduction <add>, %134, %cst_87 [1] : vector<8x256xf32> to vector<8xf32>
    %136 = vector.shape_cast %135 : vector<8xf32> to vector<8x1xf32>
    %c0_88 = arith.constant 0 : index
    %c0_89 = arith.constant 0 : index
    %c0_90 = arith.constant 0 : index
    %c0_91 = arith.constant 0 : index
    %137 = vector.load %arg8[%c0_88, %c0_89, %c0_90, %c0_91] : memref<1x1x8x2xf32, #tpu.memory_space<vmem>>, vector<1x1x8x1xf32>
    %138 = vector.shape_cast %137 : vector<1x1x8x1xf32> to vector<8x1xf32>
    %139 = vector.shape_cast %129 : vector<8x1xf32> to vector<1x1x8x1xf32>
    tpu.vector_store %arg8[%c0_88, %c0_89, %c0_90, %c0_91], %139 {strides = array<i32>} : memref<1x1x8x2xf32, #tpu.memory_space<vmem>>, vector<1x1x8x1xf32>,
    %c0_92 = arith.constant 0 : index
    %c0_93 = arith.constant 0 : index
    %c0_94 = arith.constant 0 : index
    %c1_95 = arith.constant 1 : index
    %140 = vector.load %arg8[%c0_92, %c0_93, %c0_94, %c1_95] : memref<1x1x8x2xf32, #tpu.memory_space<vmem>>, vector<1x1x8x1xf32>
    %141 = vector.shape_cast %140 : vector<1x1x8x1xf32> to vector<8x1xf32>
    %142 = vector.shape_cast %136 : vector<8x1xf32> to vector<1x1x8x1xf32>
    tpu.vector_store %arg8[%c0_92, %c0_93, %c0_94, %c1_95], %142 {strides = array<i32>} : memref<1x1x8x2xf32, #tpu.memory_space<vmem>>, vector<1x1x8x1xf32>,
    return
  }
  func.func @transform_0(%arg0: i32, %arg1: i32) -> (i32, i32, i32) {
    %c0_i32 = arith.constant 0 : i32
    %c0_i32_0 = arith.constant 0 : i32
    return %arg0, %c0_i32, %arg1 : i32, i32, i32
  }
  func.func @transform_1(%arg0: i32, %arg1: i32) -> (i32, i32, i32) {
    %c2_i32 = arith.constant 2 : i32
    %0 = arith.muli %arg1, %c2_i32 : i32
    %c1_i32 = arith.constant 1 : i32
    %1 = arith.subi %0, %c1_i32 : i32
    %c0_i32 = arith.constant 0 : i32
    %2 = arith.maxsi %1, %c0_i32 : i32
    %c0_i32_0 = arith.constant 0 : i32
    %c0_i32_1 = arith.constant 0 : i32
    return %arg0, %c0_i32_0, %2 : i32, i32, i32
  }
  func.func @transform_2(%arg0: i32, %arg1: i32) -> (i32, i32, i32) {
    %c1_i32 = arith.constant 1 : i32
    %0 = arith.addi %arg1, %c1_i32 : i32
    %c2_i32 = arith.constant 2 : i32
    %1 = arith.muli %0, %c2_i32 : i32
    %c3_i32 = arith.constant 3 : i32
    %2 = arith.minsi %1, %c3_i32 : i32
    %c0_i32 = arith.constant 0 : i32
    %c0_i32_0 = arith.constant 0 : i32
    return %arg0, %c0_i32, %2 : i32, i32, i32
  }
  func.func @transform_3(%arg0: i32, %arg1: i32) -> (i32, i32) {
    %c0_i32 = arith.constant 0 : i32
    %c0_i32_0 = arith.constant 0 : i32
    %c0_i32_1 = arith.constant 0 : i32
    return %c0_i32, %c0_i32_0 : i32, i32
  }
  func.func @transform_4(%arg0: i32, %arg1: i32) -> (i32, i32) {
    %c0_i32 = arith.constant 0 : i32
    %c0_i32_0 = arith.constant 0 : i32
    %c0_i32_1 = arith.constant 0 : i32
    return %c0_i32, %c0_i32_0 : i32, i32
  }
  func.func @transform_5(%arg0: i32, %arg1: i32) -> (i32, i32, i32) {
    %c0_i32 = arith.constant 0 : i32
    %c0_i32_0 = arith.constant 0 : i32
    return %arg0, %c0_i32, %arg1 : i32, i32, i32
  }
  func.func @transform_6(%arg0: i32, %arg1: i32) -> (i32, i32, i32, i32) {
    %c0_i32 = arith.constant 0 : i32
    %c0_i32_0 = arith.constant 0 : i32
    %c0_i32_1 = arith.constant 0 : i32
    return %arg0, %arg1, %c0_i32, %c0_i32_0 : i32, i32, i32, i32
  }
}

module attributes {stable_mosaic.version = 11 : i64} {
  func.func @_bn_lrelu_kernel(%arg0: i32, %arg1: i32, %arg2: memref<1x8x512xf32, #tpu.memory_space<vmem>>, %arg3: memref<8x1xf32, #tpu.memory_space<vmem>>, %arg4: memref<8x1xf32, #tpu.memory_space<vmem>>, %arg5: memref<1x8x512xf32, #tpu.memory_space<vmem>>) attributes {dimension_semantics = [#tpu.dimension_semantics<parallel>, #tpu.dimension_semantics<parallel>], iteration_bounds = array<i64: 2, 1>, scalar_prefetch = 0 : i64, scratch_operands = 0 : i64, tpu.core_type = #tpu.core_type<tc>, window_params = [{transform_indices = @transform_0, window_bounds = array<i64: 1, 8, 512>}, {pipeline_mode = #tpu.pipeline_mode<synchronous>, transform_indices = @transform_1, window_bounds = array<i64: 8, 1>}, {pipeline_mode = #tpu.pipeline_mode<synchronous>, transform_indices = @transform_2, window_bounds = array<i64: 8, 1>}, {transform_indices = @transform_3, window_bounds = array<i64: 1, 8, 512>}]} {
    %c0 = arith.constant 0 : index
    %c0_0 = arith.constant 0 : index
    %c0_1 = arith.constant 0 : index
    %0 = vector.load %arg2[%c0, %c0_0, %c0_1] : memref<1x8x512xf32, #tpu.memory_space<vmem>>, vector<1x8x512xf32>
    %c0_2 = arith.constant 0 : index
    %c0_3 = arith.constant 0 : index
    %1 = vector.load %arg3[%c0_2, %c0_3] : memref<8x1xf32, #tpu.memory_space<vmem>>, vector<8x1xf32>
    %2 = vector.shape_cast %1 : vector<8x1xf32> to vector<1x8x1xf32>
    %3 = vector.broadcast %2 : vector<1x8x1xf32> to vector<1x8x512xf32>
    %4 = arith.mulf %0, %3 : vector<1x8x512xf32>
    %c0_4 = arith.constant 0 : index
    %c0_5 = arith.constant 0 : index
    %5 = vector.load %arg4[%c0_4, %c0_5] : memref<8x1xf32, #tpu.memory_space<vmem>>, vector<8x1xf32>
    %6 = vector.shape_cast %5 : vector<8x1xf32> to vector<1x8x1xf32>
    %7 = vector.broadcast %6 : vector<1x8x1xf32> to vector<1x8x512xf32>
    %8 = arith.addf %4, %7 : vector<1x8x512xf32>
    %cst = arith.constant 0.000000e+00 : f32
    %9 = vector.broadcast %cst : f32 to vector<1x8x512xf32>
    %10 = arith.cmpf oge, %8, %9 : vector<1x8x512xf32>
    %cst_6 = arith.constant 2.000000e-01 : f32
    %11 = vector.broadcast %cst_6 : f32 to vector<1x8x512xf32>
    %12 = arith.mulf %11, %8 : vector<1x8x512xf32>
    %13 = arith.select %10, %8, %12 : vector<1x8x512xi1>, vector<1x8x512xf32>
    %c0_7 = arith.constant 0 : index
    %c0_8 = arith.constant 0 : index
    %c0_9 = arith.constant 0 : index
    %14 = vector.load %arg5[%c0_7, %c0_8, %c0_9] : memref<1x8x512xf32, #tpu.memory_space<vmem>>, vector<1x8x512xf32>
    tpu.vector_store %arg5[%c0_7, %c0_8, %c0_9], %13 {strides = array<i32>} : memref<1x8x512xf32, #tpu.memory_space<vmem>>, vector<1x8x512xf32>,
    return
  }
  func.func @transform_0(%arg0: i32, %arg1: i32) -> (i32, i32, i32) {
    %c0_i32 = arith.constant 0 : i32
    %c0_i32_0 = arith.constant 0 : i32
    return %arg0, %c0_i32, %arg1 : i32, i32, i32
  }
  func.func @transform_1(%arg0: i32, %arg1: i32) -> (i32, i32) {
    %c0_i32 = arith.constant 0 : i32
    %c0_i32_0 = arith.constant 0 : i32
    %c0_i32_1 = arith.constant 0 : i32
    return %c0_i32, %c0_i32_0 : i32, i32
  }
  func.func @transform_2(%arg0: i32, %arg1: i32) -> (i32, i32) {
    %c0_i32 = arith.constant 0 : i32
    %c0_i32_0 = arith.constant 0 : i32
    %c0_i32_1 = arith.constant 0 : i32
    return %c0_i32, %c0_i32_0 : i32, i32
  }
  func.func @transform_3(%arg0: i32, %arg1: i32) -> (i32, i32, i32) {
    %c0_i32 = arith.constant 0 : i32
    %c0_i32_0 = arith.constant 0 : i32
    return %arg0, %c0_i32, %arg1 : i32, i32, i32
  }
}

</mosaic_0001>

<llo_original>
// kernel: conv3d3x3_block.3
$region0: #{conv3d3x3_block.3}
  #allocation0 [shape = 'u32[]', space=smem, size = 0x4, offset = 0x4, fixed_abs, tag = 'smem constant byte address 0x4 - core index']
  #allocation1 [shape = 'u32[144,128]{1,0:T(1,128)}', space=vmem, size = 0x12000, scoped, tag = 'internal scratch']
  %s0 = inlined_call_operand.vmem [shape: f32[2,8,512], index: 0, kind: input, shape index: {}, may-alias: {0,3}]
  %s1 = inlined_call_operand.vmem [shape: f32[8,1], index: 1, kind: input, shape index: {}]
  %s2 = inlined_call_operand.vmem [shape: f32[8,1], index: 2, kind: input, shape index: {}]
  %s3 = inlined_call_operand.vmem [shape: f32[2,8,512], index: 3, kind: output, shape index: {}, may-alias: {0,3}]
  %s4 = sld [smem:[#allocation0]]
  $region45: #{conv3d3x3_block.3} parent=0
    _
  %s6 = ssub.s32 1, %s4
  %s7 = scalar_select 0, %s6, %s4
  loop: start=0, step=1, limit=4
  $region2: #{conv3d3x3_block.3} parent=0 // loop_pre_header
    _
  $region3: #{conv3d3x3_block.3} parent=0 // loop_header
    %s9 = sphi 0, %s13
    %p10 = scmp.ge.s32.totalorder %s9, 4
    %s16 = sphi 0, %s28
    %s17 = sphi 0, %s24
    %s18 = sphi 0, %s16
    %s19 = sphi 0, %s17
    %s20 = sphi 0, %s18
    %s21 = sphi 0, %s19
    %s33 = sphi 0, %s35
    %s36 = sphi 0, %s33
    %s37 = sphi 0, %s36
    %s53 = sphi 0, %s37
    %s57 = sphi 0, %s57
    %s59 = sphi 0, %s57
    %s60 = sphi 0, %s59
    %s74 = sphi 0, %s60
    %s78 = sphi 0, %s78
    %s80 = sphi 0, %s78
    %s81 = sphi 0, %s80
    %s95 = sphi 0, %s81
    %s103 = sphi 0, %s105
    %s106 = sphi 0, %s103
    %s107 = sphi 0, %s106
    %s123 = sphi 0, %s107
  $region4: #{conv3d3x3_block.3} parent=0 // loop_header_branch
    %12 = sbr.rel (%p10) target = $region8
  $region5: #{conv3d3x3_block.3} parent=0 // loop_body
    %s14 = ssub.s32 %s9, 1
    %s15 = ssub.s32 %s9, 2
    %s22 = sadd.s32 1, %s17
    %p23 = scmp.ge.s32.totalorder %s22, 1
    %s24 = scalar_select %p23, 0, %s22
    %s25 = sadd.s32 1, %s16
    %s26 = scalar_select %p23, %s25, %s16
    %p27 = scmp.ge.s32.totalorder %s26, 2
    %s28 = scalar_select %p27, 0, %s26
    %s29 = ssub.s32 %s16, %s28
    %s30 = ssub.s32 %s17, %s24
    %s31 = sor.u32 %s29, %s30
    %p32 = scmp.eq.s32.totalorder %s31, 0
    %s34 = sadd.s32 %s33, 1
    %s35 = scalar_select %p32, %s33, %s34
    %p38 = pneg %p32
    %p39 = scmp.eq.s32.totalorder %s9, 1
    %p40 = por %p38, %p39
    %p41 = scmp.ne.s32.totalorder %s33, %s36
    %p42 = scmp.eq.s32.totalorder %s9, 0
    %p43 = por %p41, %p42
    %p44 = scmp.ne.s32.totalorder %s33, %s36
    %p45 = scmp.eq.s32.totalorder %s14, 1
    %p46 = por %p44, %p45
    %p47 = scmp.ne.s32.totalorder %s36, %s37
    %p48 = scmp.eq.s32.totalorder %s14, 0
    %p49 = por %p47, %p48
    %p50 = scmp.ne.s32.totalorder %s36, %s37
    %p51 = scmp.eq.s32.totalorder %s15, 1
    %p52 = por %p50, %p51
    %p54 = scmp.ne.s32.totalorder %s37, %s53
    %p55 = scmp.eq.s32.totalorder %s15, 0
    %p56 = por %p54, %p55
    %s58 = sadd.s32 %s57, 1
    %p61 = scmp.eq.s32.totalorder %s9, 1
    %p62 = scmp.ne.s32.totalorder %s57, %s59
    %p63 = scmp.eq.s32.totalorder %s9, 0
    %p64 = por %p62, %p63
    %p65 = scmp.ne.s32.totalorder %s57, %s59
    %p66 = scmp.eq.s32.totalorder %s14, 1
    %p67 = por %p65, %p66
    %p68 = scmp.ne.s32.totalorder %s59, %s60
    %p69 = scmp.eq.s32.totalorder %s14, 0
    %p70 = por %p68, %p69
    %p71 = scmp.ne.s32.totalorder %s59, %s60
    %p72 = scmp.eq.s32.totalorder %s15, 1
    %p73 = por %p71, %p72
    %p75 = scmp.ne.s32.totalorder %s60, %s74
    %p76 = scmp.eq.s32.totalorder %s15, 0
    %p77 = por %p75, %p76
    %s79 = sadd.s32 %s78, 1
    %p82 = scmp.eq.s32.totalorder %s9, 1
    %p83 = scmp.ne.s32.totalorder %s78, %s80
    %p84 = scmp.eq.s32.totalorder %s9, 0
    %p85 = por %p83, %p84
    %p86 = scmp.ne.s32.totalorder %s78, %s80
    %p87 = scmp.eq.s32.totalorder %s14, 1
    %p88 = por %p86, %p87
    %p89 = scmp.ne.s32.totalorder %s80, %s81
    %p90 = scmp.eq.s32.totalorder %s14, 0
    %p91 = por %p89, %p90
    %p92 = scmp.ne.s32.totalorder %s80, %s81
    %p93 = scmp.eq.s32.totalorder %s15, 1
    %p94 = por %p92, %p93
    %p96 = scmp.ne.s32.totalorder %s81, %s95
    %p97 = scmp.eq.s32.totalorder %s15, 0
    %p98 = por %p96, %p97
    %s99 = ssub.s32 %s16, %s28
    %s100 = ssub.s32 %s17, %s24
    %s101 = sor.u32 %s99, %s100
    %p102 = scmp.eq.s32.totalorder %s101, 0
    %s104 = sadd.s32 %s103, 1
    %s105 = scalar_select %p102, %s103, %s104
    %p108 = pneg %p102
    %p109 = scmp.eq.s32.totalorder %s9, 1
    %p110 = por %p108, %p109
    %p111 = scmp.ne.s32.totalorder %s103, %s106
    %p112 = scmp.eq.s32.totalorder %s9, 0
    %p113 = por %p111, %p112
    %p114 = scmp.ne.s32.totalorder %s103, %s106
    %p115 = scmp.eq.s32.totalorder %s14, 1
    %p116 = por %p114, %p115
    %p117 = scmp.ne.s32.totalorder %s106, %s107
    %p118 = scmp.eq.s32.totalorder %s14, 0
    %p119 = por %p117, %p118
    %p120 = scmp.ne.s32.totalorder %s106, %s107
    %p121 = scmp.eq.s32.totalorder %s15, 1
    %p122 = por %p120, %p121
    %p124 = scmp.ne.s32.totalorder %s107, %s123
    %p125 = scmp.eq.s32.totalorder %s15, 0
    %p126 = por %p124, %p125
    %p127 = scmp.le.s32.totalorder 1, %s9
    %p128 = scmp.lt.s32.totalorder %s9, 3
    %p129 = pnand %p127, %p128
    %p130 = pneg %p129
    // Predicated region
    $region9: #{conv3d3x3_block.3} parent=5 // pred_check
      _
    $region10: #{conv3d3x3_block.3} parent=5 // pred_check_branch
      %132 = sbr.rel (%p129) target = $region12
    $region11: #{conv3d3x3_block.3} parent=5 // pred_region
      %s133 = ssub.s32 %s9, 1
      // Predicated region
      $region13: #{conv3d3x3_block.3} parent=11 // pred_check
        %p134 = pneg %p70
      $region14: #{conv3d3x3_block.3} parent=11 // pred_check_branch
        %136 = sbr.rel (%p134) target = $region16
      $region15: #{conv3d3x3_block.3} parent=11 // pred_region
        _
      $region16: #{conv3d3x3_block.3} parent=11 // pred_fallthru
        _
      // Predicated region
      $region17: #{conv3d3x3_block.3} parent=11 // pred_check
        %p137 = pneg %p91
      $region18: #{conv3d3x3_block.3} parent=11 // pred_check_branch
        %139 = sbr.rel (%p137) target = $region20
      $region19: #{conv3d3x3_block.3} parent=11 // pred_region
        _
      $region20: #{conv3d3x3_block.3} parent=11 // pred_fallthru
        _
    $region12: #{conv3d3x3_block.3} parent=5 // pred_fallthru
      _
    %p140 = scmp.lt.s32.totalorder %s9, 2
    // Predicated region
    $region21: #{conv3d3x3_block.3} parent=5 // pred_check
      %p141 = pneg %p140
    $region22: #{conv3d3x3_block.3} parent=5 // pred_check_branch
      %143 = sbr.rel (%p141) target = $region24
    $region23: #{conv3d3x3_block.3} parent=5 // pred_region
      // Predicated region
      $region25: #{conv3d3x3_block.3} parent=23 // pred_check
        %p144 = pneg %p43
      $region26: #{conv3d3x3_block.3} parent=23 // pred_check_branch
        %146 = sbr.rel (%p144) target = $region28
      $region27: #{conv3d3x3_block.3} parent=23 // pred_region
        %s147 = smul.u32 4, %s17
        %p148 = scmp.lt.s32.totalorder %s16, 1
        %s149 = scalar_select %p148, %s16, 1
        %p150 = scmp.lt.s32.totalorder %s147, 3
        %s151 = scalar_select %p150, %s147, 3
        %s152 = smul.addr %s149, 4
        %s153 = sadd.s32 %s151, %s152
        %s154 = smul.addr %s153, 8
        %s155 = scalar_lea.vmem %s0, %s154
        %s156 = smul.u32 4, %s17
      $region28: #{conv3d3x3_block.3} parent=23 // pred_fallthru
        _
    $region24: #{conv3d3x3_block.3} parent=5 // pred_fallthru
      _
    %p157 = scmp.le.s32.totalorder 1, %s9
    %p158 = scmp.lt.s32.totalorder %s9, 3
    %p159 = pnand %p157, %p158
    %p160 = pneg %p159
    // Predicated region
    $region29: #{conv3d3x3_block.3} parent=5 // pred_check
      _
    $region30: #{conv3d3x3_block.3} parent=5 // pred_check_branch
      %162 = sbr.rel (%p159) target = $region32
    $region31: #{conv3d3x3_block.3} parent=5 // pred_region
      %s163 = ssub.s32 %s9, 1
      %s164 = smul.u32 4, %s19
      %p165 = scmp.lt.s32.totalorder %s18, 1
      %s166 = scalar_select %p165, %s18, 1
      %p167 = scmp.lt.s32.totalorder %s164, 3
      %s168 = scalar_select %p167, %s164, 3
      %s169 = smul.addr %s166, 4
      %s170 = sadd.s32 %s168, %s169
      %s171 = smul.addr %s170, 8
      %s172 = scalar_lea.vmem %s0, %s171
      %p173 = pneg %p49
      %p174 = pneg %p46
      %p175 = pneg %p70
      %p176 = pneg %p67
      %p177 = pneg %p91
      %p178 = pneg %p88
      %p179 = pneg %p119
      %p180 = pneg %p116
      %s181 = smul.u32 4, %s19
      %p182 = scmp.lt.s32.totalorder %s18, 1
      %s183 = scalar_select %p182, %s18, 1
      %p184 = scmp.lt.s32.totalorder %s181, 3
      %s185 = scalar_select %p184, %s181, 3
      %s186 = smul.addr %s183, 4
      %s187 = sadd.s32 %s185, %s186
      %s188 = smul.addr %s187, 8
      %s189 = scalar_lea.vmem %s3, %s188
      %s190 = smul.u32 4, %s19
      %p191 = scmp.lt.s32.totalorder %s18, 1
      %s192 = scalar_select %p191, %s18, 1
      %p193 = scmp.lt.s32.totalorder %s190, 3
      %s194 = scalar_select %p193, %s190, 3
      %s195 = smul.addr %s192, 4
      %s196 = sadd.s32 %s194, %s195
      %s197 = smul.addr %s196, 8
      %s198 = scalar_lea.vmem %s0, %s197
      %s199 = smul.u32 4, %s19
      %s200 = smul.u32 4, %s19
      %p201 = scmp.lt.s32.totalorder %s18, 1
      %s202 = scalar_select %p201, %s18, 1
      %p203 = scmp.lt.s32.totalorder %s200, 3
      %s204 = scalar_select %p203, %s200, 3
      %s205 = smul.addr %s202, 4
      %s206 = sadd.s32 %s204, %s205
      %s207 = smul.addr %s206, 8
      %s208 = scalar_lea.vmem %s3, %s207
      %s209 = smul.u32 4, %s19
      %v210 = vld [vmem:[%s198] sm:$0xff]
      %v211 = vld [vmem:[%s198 + $0x8] sm:$0xff]
      %v212 = vld [vmem:[%s198 + $0x10] sm:$0xff]
      %v213 = vld [vmem:[%s198 + $0x18] sm:$0xff]
      %v214 = vld [vmem:[%s1] sm:$0xff]
      %216 = vset.pattern.permute.xlu0 0
      %217 = vperm.xlu0 %216, %v214
      %v218 = vpop.permute.xlu0 %217
      %v220 = vmul.f32 %v210, %v218
      %v221 = vmul.f32 %v211, %v218
      %v222 = vmul.f32 %v212, %v218
      %v223 = vmul.f32 %v213, %v218
      %v224 = vld [vmem:[%s2] sm:$0xff]
      %226 = vset.pattern.permute.xlu0 0
      %227 = vperm.xlu0 %226, %v224
      %v228 = vpop.permute.xlu0 %227
      %v230 = vadd.f32 %v220, %v228
      %v231 = vadd.f32 %v221, %v228
      %v232 = vadd.f32 %v222, %v228
      %v233 = vadd.f32 %v223, %v228
      %vm234 = vcmp.ge.f32.partialorder %v230, 0.0
      %vm235 = vcmp.ge.f32.partialorder %v231, 0.0
      %vm236 = vcmp.ge.f32.partialorder %v232, 0.0
      %vm237 = vcmp.ge.f32.partialorder %v233, 0.0
      %v238 = vmul.f32 %v230, 0.2
      %v239 = vmul.f32 %v231, 0.2
      %v240 = vmul.f32 %v232, 0.2
      %v241 = vmul.f32 %v233, 0.2
      %v242 = vsel %vm234, %v230, %v238
      %v243 = vsel %vm235, %v231, %v239
      %v244 = vsel %vm236, %v232, %v240
      %v245 = vsel %vm237, %v233, %v241
      %246 = vst [vmem:[%s208] sm:$0xff] %v242
      %247 = vst [vmem:[%s208 + $0x8] sm:$0xff] %v243
      %248 = vst [vmem:[%s208 + $0x10] sm:$0xff] %v244
      %249 = vst [vmem:[%s208 + $0x18] sm:$0xff] %v245
      %s250 = smul.u32 4, %s19
      %p251 = scmp.lt.s32.totalorder %s18, 1
      %s252 = scalar_select %p251, %s18, 1
      %p253 = scmp.lt.s32.totalorder %s250, 3
      %s254 = scalar_select %p253, %s250, 3
      %s255 = smul.addr %s252, 4
      %s256 = sadd.s32 %s254, %s255
      %s257 = smul.addr %s256, 8
      %s258 = scalar_lea.vmem %s3, %s257
      // Predicated region
      $region33: #{conv3d3x3_block.3} parent=31 // pred_check
        %p259 = pneg %p116
      $region34: #{conv3d3x3_block.3} parent=31 // pred_check_branch
        %261 = sbr.rel (%p259) target = $region36
      $region35: #{conv3d3x3_block.3} parent=31 // pred_region
        %s262 = smul.u32 4, %s19
      $region36: #{conv3d3x3_block.3} parent=31 // pred_fallthru
        _
    $region32: #{conv3d3x3_block.3} parent=5 // pred_fallthru
      _
    %p263 = scmp.le.s32.totalorder 2, %s9
    // Predicated region
    $region37: #{conv3d3x3_block.3} parent=5 // pred_check
      %p264 = pneg %p263
    $region38: #{conv3d3x3_block.3} parent=5 // pred_check_branch
      %266 = sbr.rel (%p264) target = $region40
    $region39: #{conv3d3x3_block.3} parent=5 // pred_region
      %s267 = ssub.s32 %s9, 2
      // Predicated region
      $region41: #{conv3d3x3_block.3} parent=39 // pred_check
        %p268 = pneg %p122
      $region42: #{conv3d3x3_block.3} parent=39 // pred_check_branch
        %270 = sbr.rel (%p268) target = $region44
      $region43: #{conv3d3x3_block.3} parent=39 // pred_region
        %s271 = smul.u32 4, %s21
        %p272 = scmp.lt.s32.totalorder %s20, 1
        %s273 = scalar_select %p272, %s20, 1
        %p274 = scmp.lt.s32.totalorder %s271, 3
        %s275 = scalar_select %p274, %s271, 3
        %s276 = smul.addr %s273, 4
        %s277 = sadd.s32 %s275, %s276
        %s278 = smul.addr %s277, 8
        %s279 = scalar_lea.vmem %s3, %s278
      $region44: #{conv3d3x3_block.3} parent=39 // pred_fallthru
        _
    $region40: #{conv3d3x3_block.3} parent=5 // pred_fallthru
      _
  $region6: #{conv3d3x3_block.3} parent=0 // loop_footer
    %s13 = sadd.s32 1, %s9
  $region7: #{conv3d3x3_block.3} parent=0 // loop_footer_branch
    %8 = sbr.rel target = $region3
  $region8: #{conv3d3x3_block.3} parent=0 // loop_exit
    _

// kernel: conv3d3x3_block.2
$region0: #{conv3d3x3_block.2}
  #allocation0 [shape = 'u32[]', space=smem, size = 0x4, offset = 0x4, fixed_abs, tag = 'smem constant byte address 0x4 - core index']
  #allocation1 [shape = 'u32[144,128]{1,0:T(1,128)}', space=vmem, size = 0x12000, scoped, tag = 'internal scratch']
  #allocation2 [shape = 'f32[4,512]{1,0:T(4,128)}', space=vmem, size = 0x2000, scoped, tag = 'scratch operand']
  #allocation3 [shape = 'f32[108,256]{1,0:T(8,128)}', space=vmem, size = 0x1c000, scoped, tag = 'scratch operand']
  %s0 = inlined_call_operand.vmem [shape: f32[2,4,512], index: 0, kind: input, shape index: {}, may-alias: {0,1,2}]
  %s1 = inlined_call_operand.vmem [shape: f32[2,4,512], index: 1, kind: input, shape index: {}, may-alias: {0,1,2}]
  %s2 = inlined_call_operand.vmem [shape: f32[2,4,512], index: 2, kind: input, shape index: {}, may-alias: {0,1,2}]
  %s3 = inlined_call_operand.vmem [shape: f32[8,108], index: 3, kind: input, shape index: {}]
  %s4 = inlined_call_operand.vmem [shape: f32[9,256], index: 4, kind: input, shape index: {}]
  %s5 = inlined_call_operand.vmem [shape: f32[2,8,512], index: 5, kind: output, shape index: {0}]
  %s6 = inlined_call_operand.vmem [shape: f32[2,2,8,2], index: 6, kind: output, shape index: {1}]
  %7 = xla_tuple %s5, %s6
  %s8 = sld [smem:[#allocation0]]
  $region69: #{conv3d3x3_block.2} parent=0
    _
  %s10 = ssub.s32 1, %s8
  %s11 = scalar_select 0, %s10, %s8
  loop: start=0, step=1, limit=6
  $region2: #{conv3d3x3_block.2} parent=0 // loop_pre_header
    _
  $region3: #{conv3d3x3_block.2} parent=0 // loop_header
    %s13 = sphi 0, %s17
    %p14 = scmp.ge.s32.totalorder %s13, 6
    %s20 = sphi 0, %s32
    %s21 = sphi 0, %s28
    %s22 = sphi 0, %s20
    %s23 = sphi 0, %s21
    %s24 = sphi 0, %s22
    %s25 = sphi 0, %s23
    %s37 = sphi 0, %s39
    %s40 = sphi 0, %s37
    %s41 = sphi 0, %s40
    %s57 = sphi 0, %s41
    %s73 = sphi 0, %s75
    %s76 = sphi 0, %s73
    %s77 = sphi 0, %s76
    %s93 = sphi 0, %s77
    %s109 = sphi 0, %s111
    %s112 = sphi 0, %s109
    %s113 = sphi 0, %s112
    %s129 = sphi 0, %s113
    %s133 = sphi 0, %s133
    %s135 = sphi 0, %s133
    %s136 = sphi 0, %s135
    %s150 = sphi 0, %s136
    %s154 = sphi 0, %s154
    %s156 = sphi 0, %s154
    %s157 = sphi 0, %s156
    %s171 = sphi 0, %s157
    %s179 = sphi 0, %s181
    %s182 = sphi 0, %s179
    %s183 = sphi 0, %s182
    %s199 = sphi 0, %s183
    %s207 = sphi 0, %s209
    %s210 = sphi 0, %s207
    %s211 = sphi 0, %s210
    %s227 = sphi 0, %s211
  $region4: #{conv3d3x3_block.2} parent=0 // loop_header_branch
    %16 = sbr.rel (%p14) target = $region8
  $region5: #{conv3d3x3_block.2} parent=0 // loop_body
    %s18 = ssub.s32 %s13, 1
    %s19 = ssub.s32 %s13, 2
    %s26 = sadd.s32 1, %s21
    %p27 = scmp.ge.s32.totalorder %s26, 2
    %s28 = scalar_select %p27, 0, %s26
    %s29 = sadd.s32 1, %s20
    %s30 = scalar_select %p27, %s29, %s20
    %p31 = scmp.ge.s32.totalorder %s30, 2
    %s32 = scalar_select %p31, 0, %s30
    %s33 = ssub.s32 %s20, %s32
    %s34 = ssub.s32 %s21, %s28
    %s35 = sor.u32 %s33, %s34
    %p36 = scmp.eq.s32.totalorder %s35, 0
    %s38 = sadd.s32 %s37, 1
    %s39 = scalar_select %p36, %s37, %s38
    %p42 = pneg %p36
    %p43 = scmp.eq.s32.totalorder %s13, 3
    %p44 = por %p42, %p43
    %p45 = scmp.ne.s32.totalorder %s37, %s40
    %p46 = scmp.eq.s32.totalorder %s13, 0
    %p47 = por %p45, %p46
    %p48 = scmp.ne.s32.totalorder %s37, %s40
    %p49 = scmp.eq.s32.totalorder %s18, 3
    %p50 = por %p48, %p49
    %p51 = scmp.ne.s32.totalorder %s40, %s41
    %p52 = scmp.eq.s32.totalorder %s18, 0
    %p53 = por %p51, %p52
    %p54 = scmp.ne.s32.totalorder %s40, %s41
    %p55 = scmp.eq.s32.totalorder %s19, 3
    %p56 = por %p54, %p55
    %p58 = scmp.ne.s32.totalorder %s41, %s57
    %p59 = scmp.eq.s32.totalorder %s19, 0
    %p60 = por %p58, %p59
    %s61 = smul.u32 %s21, 2
    %s62 = ssub.s32 %s61, 1
    %p63 = scmp.gt.s32.totalorder %s62, 0
    %s64 = scalar_select %p63, %s62, 0
    %s65 = smul.u32 %s28, 2
    %s66 = ssub.s32 %s65, 1
    %p67 = scmp.gt.s32.totalorder %s66, 0
    %s68 = scalar_select %p67, %s66, 0
    %s69 = ssub.s32 %s20, %s32
    %s70 = ssub.s32 %s64, %s68
    %s71 = sor.u32 %s69, %s70
    %p72 = scmp.eq.s32.totalorder %s71, 0
    %s74 = sadd.s32 %s73, 1
    %s75 = scalar_select %p72, %s73, %s74
    %p78 = pneg %p72
    %p79 = scmp.eq.s32.totalorder %s13, 3
    %p80 = por %p78, %p79
    %p81 = scmp.ne.s32.totalorder %s73, %s76
    %p82 = scmp.eq.s32.totalorder %s13, 0
    %p83 = por %p81, %p82
    %p84 = scmp.ne.s32.totalorder %s73, %s76
    %p85 = scmp.eq.s32.totalorder %s18, 3
    %p86 = por %p84, %p85
    %p87 = scmp.ne.s32.totalorder %s76, %s77
    %p88 = scmp.eq.s32.totalorder %s18, 0
    %p89 = por %p87, %p88
    %p90 = scmp.ne.s32.totalorder %s76, %s77
    %p91 = scmp.eq.s32.totalorder %s19, 3
    %p92 = por %p90, %p91
    %p94 = scmp.ne.s32.totalorder %s77, %s93
    %p95 = scmp.eq.s32.totalorder %s19, 0
    %p96 = por %p94, %p95
    %s97 = sadd.s32 %s21, 1
    %s98 = smul.u32 %s97, 2
    %p99 = scmp.lt.s32.totalorder %s98, 3
    %s100 = scalar_select %p99, %s98, 3
    %s101 = sadd.s32 %s28, 1
    %s102 = smul.u32 %s101, 2
    %p103 = scmp.lt.s32.totalorder %s102, 3
    %s104 = scalar_select %p103, %s102, 3
    %s105 = ssub.s32 %s20, %s32
    %s106 = ssub.s32 %s100, %s104
    %s107 = sor.u32 %s105, %s106
    %p108 = scmp.eq.s32.totalorder %s107, 0
    %s110 = sadd.s32 %s109, 1
    %s111 = scalar_select %p108, %s109, %s110
    %p114 = pneg %p108
    %p115 = scmp.eq.s32.totalorder %s13, 3
    %p116 = por %p114, %p115
    %p117 = scmp.ne.s32.totalorder %s109, %s112
    %p118 = scmp.eq.s32.totalorder %s13, 0
    %p119 = por %p117, %p118
    %p120 = scmp.ne.s32.totalorder %s109, %s112
    %p121 = scmp.eq.s32.totalorder %s18, 3
    %p122 = por %p120, %p121
    %p123 = scmp.ne.s32.totalorder %s112, %s113
    %p124 = scmp.eq.s32.totalorder %s18, 0
    %p125 = por %p123, %p124
    %p126 = scmp.ne.s32.totalorder %s112, %s113
    %p127 = scmp.eq.s32.totalorder %s19, 3
    %p128 = por %p126, %p127
    %p130 = scmp.ne.s32.totalorder %s113, %s129
    %p131 = scmp.eq.s32.totalorder %s19, 0
    %p132 = por %p130, %p131
    %s134 = sadd.s32 %s133, 1
    %p137 = scmp.eq.s32.totalorder %s13, 3
    %p138 = scmp.ne.s32.totalorder %s133, %s135
    %p139 = scmp.eq.s32.totalorder %s13, 0
    %p140 = por %p138, %p139
    %p141 = scmp.ne.s32.totalorder %s133, %s135
    %p142 = scmp.eq.s32.totalorder %s18, 3
    %p143 = por %p141, %p142
    %p144 = scmp.ne.s32.totalorder %s135, %s136
    %p145 = scmp.eq.s32.totalorder %s18, 0
    %p146 = por %p144, %p145
    %p147 = scmp.ne.s32.totalorder %s135, %s136
    %p148 = scmp.eq.s32.totalorder %s19, 3
    %p149 = por %p147, %p148
    %p151 = scmp.ne.s32.totalorder %s136, %s150
    %p152 = scmp.eq.s32.totalorder %s19, 0
    %p153 = por %p151, %p152
    %s155 = sadd.s32 %s154, 1
    %p158 = scmp.eq.s32.totalorder %s13, 3
    %p159 = scmp.ne.s32.totalorder %s154, %s156
    %p160 = scmp.eq.s32.totalorder %s13, 0
    %p161 = por %p159, %p160
    %p162 = scmp.ne.s32.totalorder %s154, %s156
    %p163 = scmp.eq.s32.totalorder %s18, 3
    %p164 = por %p162, %p163
    %p165 = scmp.ne.s32.totalorder %s156, %s157
    %p166 = scmp.eq.s32.totalorder %s18, 0
    %p167 = por %p165, %p166
    %p168 = scmp.ne.s32.totalorder %s156, %s157
    %p169 = scmp.eq.s32.totalorder %s19, 3
    %p170 = por %p168, %p169
    %p172 = scmp.ne.s32.totalorder %s157, %s171
    %p173 = scmp.eq.s32.totalorder %s19, 0
    %p174 = por %p172, %p173
    %s175 = ssub.s32 %s20, %s32
    %s176 = ssub.s32 %s21, %s28
    %s177 = sor.u32 %s175, %s176
    %p178 = scmp.eq.s32.totalorder %s177, 0
    %s180 = sadd.s32 %s179, 1
    %s181 = scalar_select %p178, %s179, %s180
    %p184 = pneg %p178
    %p185 = scmp.eq.s32.totalorder %s13, 3
    %p186 = por %p184, %p185
    %p187 = scmp.ne.s32.totalorder %s179, %s182
    %p188 = scmp.eq.s32.totalorder %s13, 0
    %p189 = por %p187, %p188
    %p190 = scmp.ne.s32.totalorder %s179, %s182
    %p191 = scmp.eq.s32.totalorder %s18, 3
    %p192 = por %p190, %p191
    %p193 = scmp.ne.s32.totalorder %s182, %s183
    %p194 = scmp.eq.s32.totalorder %s18, 0
    %p195 = por %p193, %p194
    %p196 = scmp.ne.s32.totalorder %s182, %s183
    %p197 = scmp.eq.s32.totalorder %s19, 3
    %p198 = por %p196, %p197
    %p200 = scmp.ne.s32.totalorder %s183, %s199
    %p201 = scmp.eq.s32.totalorder %s19, 0
    %p202 = por %p200, %p201
    %s203 = ssub.s32 %s20, %s32
    %s204 = ssub.s32 %s21, %s28
    %s205 = sor.u32 %s203, %s204
    %p206 = scmp.eq.s32.totalorder %s205, 0
    %s208 = sadd.s32 %s207, 1
    %s209 = scalar_select %p206, %s207, %s208
    %p212 = pneg %p206
    %p213 = scmp.eq.s32.totalorder %s13, 3
    %p214 = por %p212, %p213
    %p215 = scmp.ne.s32.totalorder %s207, %s210
    %p216 = scmp.eq.s32.totalorder %s13, 0
    %p217 = por %p215, %p216
    %p218 = scmp.ne.s32.totalorder %s207, %s210
    %p219 = scmp.eq.s32.totalorder %s18, 3
    %p220 = por %p218, %p219
    %p221 = scmp.ne.s32.totalorder %s210, %s211
    %p222 = scmp.eq.s32.totalorder %s18, 0
    %p223 = por %p221, %p222
    %p224 = scmp.ne.s32.totalorder %s210, %s211
    %p225 = scmp.eq.s32.totalorder %s19, 3
    %p226 = por %p224, %p225
    %p228 = scmp.ne.s32.totalorder %s211, %s227
    %p229 = scmp.eq.s32.totalorder %s19, 0
    %p230 = por %p228, %p229
    %p231 = scmp.le.s32.totalorder 1, %s13
    %p232 = scmp.lt.s32.totalorder %s13, 5
    %p233 = pnand %p231, %p232
    %p234 = pneg %p233
    // Predicated region
    $region9: #{conv3d3x3_block.2} parent=5 // pred_check
      _
    $region10: #{conv3d3x3_block.2} parent=5 // pred_check_branch
      %236 = sbr.rel (%p233) target = $region12
    $region11: #{conv3d3x3_block.2} parent=5 // pred_region
      %s237 = ssub.s32 %s13, 1
      // Predicated region
      $region13: #{conv3d3x3_block.2} parent=11 // pred_check
        %p238 = pneg %p146
      $region14: #{conv3d3x3_block.2} parent=11 // pred_check_branch
        %240 = sbr.rel (%p238) target = $region16
      $region15: #{conv3d3x3_block.2} parent=11 // pred_region
        _
      $region16: #{conv3d3x3_block.2} parent=11 // pred_fallthru
        _
      // Predicated region
      $region17: #{conv3d3x3_block.2} parent=11 // pred_check
        %p241 = pneg %p167
      $region18: #{conv3d3x3_block.2} parent=11 // pred_check_branch
        %243 = sbr.rel (%p241) target = $region20
      $region19: #{conv3d3x3_block.2} parent=11 // pred_region
        _
      $region20: #{conv3d3x3_block.2} parent=11 // pred_fallthru
        _
    $region12: #{conv3d3x3_block.2} parent=5 // pred_fallthru
      _
    %p244 = scmp.lt.s32.totalorder %s13, 4
    // Predicated region
    $region21: #{conv3d3x3_block.2} parent=5 // pred_check
      %p245 = pneg %p244
    $region22: #{conv3d3x3_block.2} parent=5 // pred_check_branch
      %247 = sbr.rel (%p245) target = $region24
    $region23: #{conv3d3x3_block.2} parent=5 // pred_region
      // Predicated region
      $region25: #{conv3d3x3_block.2} parent=23 // pred_check
        %p248 = pneg %p47
      $region26: #{conv3d3x3_block.2} parent=23 // pred_check_branch
        %250 = sbr.rel (%p248) target = $region28
      $region27: #{conv3d3x3_block.2} parent=23 // pred_region
        %s251 = smul.u32 2, %s21
        %p252 = scmp.lt.s32.totalorder %s20, 1
        %s253 = scalar_select %p252, %s20, 1
        %p254 = scmp.lt.s32.totalorder %s251, 3
        %s255 = scalar_select %p254, %s251, 3
        %s256 = smul.addr %s253, 4
        %s257 = sadd.s32 %s255, %s256
        %s258 = smul.addr %s257, 4
        %s259 = scalar_lea.vmem %s0, %s258
        %s260 = smul.u32 2, %s21
      $region28: #{conv3d3x3_block.2} parent=23 // pred_fallthru
        _
      // Predicated region
      $region29: #{conv3d3x3_block.2} parent=23 // pred_check
        %p261 = pneg %p83
      $region30: #{conv3d3x3_block.2} parent=23 // pred_check_branch
        %263 = sbr.rel (%p261) target = $region32
      $region31: #{conv3d3x3_block.2} parent=23 // pred_region
        %s264 = smul.u32 %s21, 2
        %s265 = ssub.s32 %s264, 1
        %p266 = scmp.gt.s32.totalorder %s265, 0
        %s267 = scalar_select %p266, %s265, 0
        %p268 = scmp.lt.s32.totalorder %s20, 1
        %s269 = scalar_select %p268, %s20, 1
        %p270 = scmp.lt.s32.totalorder %s267, 3
        %s271 = scalar_select %p270, %s267, 3
        %s272 = smul.addr %s269, 4
        %s273 = sadd.s32 %s271, %s272
        %s274 = smul.addr %s273, 4
        %s275 = scalar_lea.vmem %s1, %s274
        %s276 = smul.u32 %s21, 2
        %s277 = ssub.s32 %s276, 1
        %p278 = scmp.gt.s32.totalorder %s277, 0
        %s279 = scalar_select %p278, %s277, 0
      $region32: #{conv3d3x3_block.2} parent=23 // pred_fallthru
        _
      // Predicated region
      $region33: #{conv3d3x3_block.2} parent=23 // pred_check
        %p280 = pneg %p119
      $region34: #{conv3d3x3_block.2} parent=23 // pred_check_branch
        %282 = sbr.rel (%p280) target = $region36
      $region35: #{conv3d3x3_block.2} parent=23 // pred_region
        %s283 = sadd.s32 %s21, 1
        %s284 = smul.u32 %s283, 2
        %p285 = scmp.lt.s32.totalorder %s284, 3
        %s286 = scalar_select %p285, %s284, 3
        %p287 = scmp.lt.s32.totalorder %s20, 1
        %s288 = scalar_select %p287, %s20, 1
        %p289 = scmp.lt.s32.totalorder %s286, 3
        %s290 = scalar_select %p289, %s286, 3
        %s291 = smul.addr %s288, 4
        %s292 = sadd.s32 %s290, %s291
        %s293 = smul.addr %s292, 4
        %s294 = scalar_lea.vmem %s2, %s293
        %s295 = sadd.s32 %s21, 1
        %s296 = smul.u32 %s295, 2
        %p297 = scmp.lt.s32.totalorder %s296, 3
        %s298 = scalar_select %p297, %s296, 3
      $region36: #{conv3d3x3_block.2} parent=23 // pred_fallthru
        _
    $region24: #{conv3d3x3_block.2} parent=5 // pred_fallthru
      _
    %p299 = scmp.le.s32.totalorder 1, %s13
    %p300 = scmp.lt.s32.totalorder %s13, 5
    %p301 = pnand %p299, %p300
    %p302 = pneg %p301
    // Predicated region
    $region37: #{conv3d3x3_block.2} parent=5 // pred_check
      _
    $region38: #{conv3d3x3_block.2} parent=5 // pred_check_branch
      %304 = sbr.rel (%p301) target = $region40
    $region39: #{conv3d3x3_block.2} parent=5 // pred_region
      %s305 = ssub.s32 %s13, 1
      %s306 = smul.u32 2, %s23
      %p307 = scmp.lt.s32.totalorder %s22, 1
      %s308 = scalar_select %p307, %s22, 1
      %p309 = scmp.lt.s32.totalorder %s306, 3
      %s310 = scalar_select %p309, %s306, 3
      %s311 = smul.addr %s308, 4
      %s312 = sadd.s32 %s310, %s311
      %s313 = smul.addr %s312, 4
      %s314 = scalar_lea.vmem %s0, %s313
      %p315 = pneg %p53
      %p316 = pneg %p50
      %s317 = smul.u32 %s23, 2
      %s318 = ssub.s32 %s317, 1
      %p319 = scmp.gt.s32.totalorder %s318, 0
      %s320 = scalar_select %p319, %s318, 0
      %p321 = scmp.lt.s32.totalorder %s22, 1
      %s322 = scalar_select %p321, %s22, 1
      %p323 = scmp.lt.s32.totalorder %s320, 3
      %s324 = scalar_select %p323, %s320, 3
      %s325 = smul.addr %s322, 4
      %s326 = sadd.s32 %s324, %s325
      %s327 = smul.addr %s326, 4
      %s328 = scalar_lea.vmem %s1, %s327
      %p329 = pneg %p89
      %p330 = pneg %p86
      %s331 = sadd.s32 %s23, 1
      %s332 = smul.u32 %s331, 2
      %p333 = scmp.lt.s32.totalorder %s332, 3
      %s334 = scalar_select %p333, %s332, 3
      %p335 = scmp.lt.s32.totalorder %s22, 1
      %s336 = scalar_select %p335, %s22, 1
      %p337 = scmp.lt.s32.totalorder %s334, 3
      %s338 = scalar_select %p337, %s334, 3
      %s339 = smul.addr %s336, 4
      %s340 = sadd.s32 %s338, %s339
      %s341 = smul.addr %s340, 4
      %s342 = scalar_lea.vmem %s2, %s341
      %p343 = pneg %p125
      %p344 = pneg %p122
      %p345 = pneg %p146
      %p346 = pneg %p143
      %p347 = pneg %p167
      %p348 = pneg %p164
      %p349 = pneg %p195
      %p350 = pneg %p192
      %s351 = smul.u32 2, %s23
      %p352 = scmp.lt.s32.totalorder %s22, 1
      %s353 = scalar_select %p352, %s22, 1
      %p354 = scmp.lt.s32.totalorder %s351, 3
      %s355 = scalar_select %p354, %s351, 3
      %s356 = smul.addr %s353, 4
      %s357 = sadd.s32 %s355, %s356
      %s358 = smul.addr %s357, 8
      %s359 = scalar_lea.vmem %s5, %s358
      %p360 = pneg %p223
      %p361 = pneg %p220
      %p362 = scmp.lt.s32.totalorder %s22, 1
      %s363 = scalar_select %p362, %s22, 1
      %p364 = scmp.lt.s32.totalorder %s23, 1
      %s365 = scalar_select %p364, %s23, 1
      %s366 = smul.addr %s363, 2
      %s367 = sadd.s32 %s365, %s366
      %s368 = smul.addr %s367, 8
      %s369 = scalar_lea.vmem %s6, %s368
      %s370 = smul.u32 2, %s23
      %p371 = scmp.lt.s32.totalorder %s22, 1
      %s372 = scalar_select %p371, %s22, 1
      %p373 = scmp.lt.s32.totalorder %s370, 3
      %s374 = scalar_select %p373, %s370, 3
      %s375 = smul.addr %s372, 4
      %s376 = sadd.s32 %s374, %s375
      %s377 = smul.addr %s376, 4
      %s378 = scalar_lea.vmem %s0, %s377
      %s379 = smul.u32 2, %s23
      %s380 = smul.u32 %s23, 2
      %s381 = ssub.s32 %s380, 1
      %p382 = scmp.gt.s32.totalorder %s381, 0
      %s383 = scalar_select %p382, %s381, 0
      %p384 = scmp.lt.s32.totalorder %s22, 1
      %s385 = scalar_select %p384, %s22, 1
      %p386 = scmp.lt.s32.totalorder %s383, 3
      %s387 = scalar_select %p386, %s383, 3
      %s388 = smul.addr %s385, 4
      %s389 = sadd.s32 %s387, %s388
      %s390 = smul.addr %s389, 4
      %s391 = scalar_lea.vmem %s1, %s390
      %s392 = smul.u32 %s23, 2
      %s393 = ssub.s32 %s392, 1
      %p394 = scmp.gt.s32.totalorder %s393, 0
      %s395 = scalar_select %p394, %s393, 0
      %s396 = sadd.s32 %s23, 1
      %s397 = smul.u32 %s396, 2
      %p398 = scmp.lt.s32.totalorder %s397, 3
      %s399 = scalar_select %p398, %s397, 3
      %p400 = scmp.lt.s32.totalorder %s22, 1
      %s401 = scalar_select %p400, %s22, 1
      %p402 = scmp.lt.s32.totalorder %s399, 3
      %s403 = scalar_select %p402, %s399, 3
      %s404 = smul.addr %s401, 4
      %s405 = sadd.s32 %s403, %s404
      %s406 = smul.addr %s405, 4
      %s407 = scalar_lea.vmem %s2, %s406
      %s408 = sadd.s32 %s23, 1
      %s409 = smul.u32 %s408, 2
      %p410 = scmp.lt.s32.totalorder %s409, 3
      %s411 = scalar_select %p410, %s409, 3
      %s412 = smul.u32 2, %s23
      %p413 = scmp.lt.s32.totalorder %s22, 1
      %s414 = scalar_select %p413, %s22, 1
      %p415 = scmp.lt.s32.totalorder %s412, 3
      %s416 = scalar_select %p415, %s412, 3
      %s417 = smul.addr %s414, 4
      %s418 = sadd.s32 %s416, %s417
      %s419 = smul.addr %s418, 8
      %s420 = scalar_lea.vmem %s5, %s419
      %s421 = smul.u32 2, %s23
      %p422 = scmp.lt.s32.totalorder %s22, 1
      %s423 = scalar_select %p422, %s22, 1
      %p424 = scmp.lt.s32.totalorder %s23, 1
      %s425 = scalar_select %p424, %s23, 1
      %s426 = smul.addr %s423, 2
      %s427 = sadd.s32 %s425, %s426
      %s428 = smul.addr %s427, 8
      %s429 = scalar_lea.vmem %s6, %s428
      %430 = vst [vmem:[#allocation2] sm:$0xf] 0.0
      %431 = vst [vmem:[#allocation2 + $0xc] sm:$0xf] 0.0
      %v432 = vld [vmem:[%s378] sm:$0xff]
      %433 = vst [vmem:[#allocation2 + $0x4] sm:$0xff] %v432
      %p434 = scmp.gt.s32.totalorder %s23, 0
      // Predicated region
      $region41: #{conv3d3x3_block.2} parent=39 // pred_check
        %p435 = pneg %p434
      $region42: #{conv3d3x3_block.2} parent=39 // pred_check_branch
        %437 = sbr.rel (%p435) target = $region44
      $region43: #{conv3d3x3_block.2} parent=39 // pred_region
        %v438 = vld [vmem:[%s391] sm:$0xf]
        %vm439 = vcmask 1043968
        %440 = vst.msk [vmem:[#allocation2] sm:$0xf] %vm439, %v438
      $region44: #{conv3d3x3_block.2} parent=39 // pred_fallthru
        _
      %p441 = scmp.lt.s32.totalorder %s23, 1
      // Predicated region
      $region45: #{conv3d3x3_block.2} parent=39 // pred_check
        %p442 = pneg %p441
      $region46: #{conv3d3x3_block.2} parent=39 // pred_check_branch
        %444 = sbr.rel (%p442) target = $region48
      $region47: #{conv3d3x3_block.2} parent=39 // pred_region
        %v445 = vld [vmem:[%s407] sm:$0xf]
        %vm446 = vcmask 519168
        %447 = vst.msk [vmem:[#allocation2 + $0xc] sm:$0xf] %vm446, %v445
      $region48: #{conv3d3x3_block.2} parent=39 // pred_fallthru
        _
      %v448 = vld [vmem:[%s4] ss:$8 sm:$0x3]
      %v449 = vld [vmem:[#allocation2] sm:$0xff]
      %v450 = vld [vmem:[#allocation2 + $0x8] sm:$0xf]
      %v452 = vlaneseq
      %v453 = vshrl.u32 %v452, 7
      %v454 = vsub.s32 0, %v453
      %v455 = vrot.slane %v448, %v454
      %v456 = vlaneseq
      %v457 = vshrl.u32 %v456, 7
      %v458 = vsub.s32 1, %v457
      %v459 = vrot.slane %v448, %v458
      %v460 = vcombine.low %v455, %v459
      %461 = vrot.lane.b32.xlu0 %v460, 55
      %v462 = vpop.permute.xlu0 %461
      %v463 = vrot.slane %v462, 4
      %vm464 = vcmask 449536
      %v465 = vsel %vm464, %v463, %v462
      %v468 = vmul.f32 %v449, %v465
      %v469 = vmul.f32 %v450, %v463
      %v472 = vcombine.high %v468, %v468
      %473 = vrot.lane.b32.xlu0 %v468, 73
      %v474 = vpop.permute.xlu0 %473
      %475 = vrot.lane.b32.xlu0 %v472, 73
      %v476 = vpop.permute.xlu0 %475
      %477 = vrot.lane.b32.xlu0 %v469, 73
      %v478 = vpop.permute.xlu0 %477
      %vm479 = vcmask 596992
      %v480 = vsel %vm479, %v474, %v476
      %v481 = vsel %vm479, %v476, %v478
      %484 = vst [vmem:[#allocation3] sm:$0xf] %v480
      %485 = vst [vmem:[#allocation3 + $0x8] sm:$0xf] %v481
      %v486 = vld [vmem:[#allocation2] sm:$0xff]
      %v487 = vld [vmem:[#allocation2 + $0x8] sm:$0xf]
      %488 = vrot.lane.b32.xlu0 %v460, 119
      %v489 = vpop.permute.xlu0 %488
      %v490 = vrot.slane %v489, 4
      %vm491 = vcmask 973824
      %v492 = vsel %vm491, %v490, %v489
      %v495 = vmul.f32 %v486, %v492
      %v496 = vmul.f32 %v487, %v490
      %v499 = vcombine.low %v495, %v495
      %v500 = vcombine.low %v496, %v496
      %501 = vrot.lane.b32.xlu0 %v499, 9
      %v502 = vpop.permute.xlu0 %501
      %503 = vrot.lane.b32.xlu0 %v495, 9
      %v504 = vpop.permute.xlu0 %503
      %505 = vrot.lane.b32.xlu0 %v500, 9
      %v506 = vpop.permute.xlu0 %505
      %vm507 = vcmask 72704
      %v508 = vsel %vm507, %v502, %v504
      %v509 = vsel %vm507, %v504, %v506
      %512 = vst [vmem:[#allocation3 + $0x40] sm:$0xf0] %v508
      %513 = vst [vmem:[#allocation3 + $0x48] sm:$0xf0] %v509
      %v514 = vld [vmem:[#allocation2 + $0x4] sm:$0xff]
      %v515 = vld [vmem:[#allocation2 + $0xc] sm:$0xf]
      %v516 = vmul.f32 %v514, %v465
      %v517 = vmul.f32 %v515, %v463
      %v520 = vcombine.high %v516, %v516
      %521 = vrot.lane.b32.xlu0 %v516, 73
      %v522 = vpop.permute.xlu0 %521
      %523 = vrot.lane.b32.xlu0 %v520, 73
      %v524 = vpop.permute.xlu0 %523
      %525 = vrot.lane.b32.xlu0 %v517, 73
      %v526 = vpop.permute.xlu0 %525
      %v527 = vsel %vm479, %v522, %v524
      %v528 = vsel %vm479, %v524, %v526
      %531 = vst [vmem:[#allocation3 + $0x90] sm:$0xf] %v527
      %532 = vst [vmem:[#allocation3 + $0x98] sm:$0xf] %v528
      %s533 = scalar_lea.vmem %s4, 1
      %v534 = vld [vmem:[%s533] ss:$8 sm:$0x3]
      %v535 = vld [vmem:[#allocation2] sm:$0xff]
      %v536 = vld [vmem:[#allocation2 + $0x8] sm:$0xf]
      %v538 = vlaneseq
      %v539 = vshrl.u32 %v538, 7
      %v540 = vsub.s32 0, %v539
      %v541 = vrot.slane %v534, %v540
      %v542 = vlaneseq
      %v543 = vshrl.u32 %v542, 7
      %v544 = vsub.s32 1, %v543
      %v545 = vrot.slane %v534, %v544
      %v546 = vcombine.low %v541, %v545
      %547 = vrot.lane.b32.xlu0 %v546, 56
      %v548 = vpop.permute.xlu0 %547
      %v549 = vrot.slane %v548, 4
      %vm550 = vcmask 457728
      %v551 = vsel %vm550, %v549, %v548
      %v554 = vmul.f32 %v535, %v551
      %v555 = vmul.f32 %v536, %v549
      %v558 = vcombine.low %v554, %v554
      %v559 = vcombine.low %v555, %v555
      %560 = vrot.lane.b32.xlu0 %v558, 72
      %v561 = vpop.permute.xlu0 %560
      %562 = vrot.lane.b32.xlu0 %v554, 72
      %v563 = vpop.permute.xlu0 %562
      %564 = vrot.lane.b32.xlu0 %v559, 72
      %v565 = vpop.permute.xlu0 %564
      %vm566 = vcmask 588800
      %v567 = vsel %vm566, %v561, %v563
      %v568 = vsel %vm566, %v563, %v565
      %571 = vst [vmem:[#allocation3] sm:$0xf0] %v567
      %572 = vst [vmem:[#allocation3 + $0x8] sm:$0xf0] %v568
      %v573 = vld [vmem:[#allocation2] sm:$0xff]
      %v574 = vld [vmem:[#allocation2 + $0x8] sm:$0xf]
      %575 = vrot.lane.b32.xlu0 %v546, 120
      %v576 = vpop.permute.xlu0 %575
      %v577 = vrot.slane %v576, 4
      %vm578 = vcmask 982016
      %v579 = vsel %vm578, %v577, %v576
      %v582 = vmul.f32 %v573, %v579
      %v583 = vmul.f32 %v574, %v577
      %v586 = vcombine.high %v582, %v582
      %587 = vrot.lane.b32.xlu0 %v582, 8
      %v588 = vpop.permute.xlu0 %587
      %589 = vrot.lane.b32.xlu0 %v586, 8
      %v590 = vpop.permute.xlu0 %589
      %591 = vrot.lane.b32.xlu0 %v583, 8
      %v592 = vpop.permute.xlu0 %591
      %vm593 = vcmask 64512
      %v594 = vsel %vm593, %v588, %v590
      %v595 = vsel %vm593, %v590, %v592
      %598 = vst [vmem:[#allocation3 + $0x50] sm:$0xf] %v594
      %599 = vst [vmem:[#allocation3 + $0x58] sm:$0xf] %v595
      %v600 = vld [vmem:[#allocation2 + $0x4] sm:$0xff]
      %v601 = vld [vmem:[#allocation2 + $0xc] sm:$0xf]
      %v602 = vmul.f32 %v600, %v551
      %v603 = vmul.f32 %v601, %v549
      %v606 = vcombine.low %v602, %v602
      %v607 = vcombine.low %v603, %v603
      %608 = vrot.lane.b32.xlu0 %v606, 72
      %v609 = vpop.permute.xlu0 %608
      %610 = vrot.lane.b32.xlu0 %v602, 72
      %v611 = vpop.permute.xlu0 %610
      %612 = vrot.lane.b32.xlu0 %v607, 72
      %v613 = vpop.permute.xlu0 %612
      %v614 = vsel %vm566, %v609, %v611
      %v615 = vsel %vm566, %v611, %v613
      %618 = vst [vmem:[#allocation3 + $0x90] sm:$0xf0] %v614
      %619 = vst [vmem:[#allocation3 + $0x98] sm:$0xf0] %v615
      %s620 = scalar_lea.vmem %s4, 2
      %v621 = vld [vmem:[%s620] ss:$8 sm:$0x3]
      %v622 = vld [vmem:[#allocation2] sm:$0xff]
      %v623 = vld [vmem:[#allocation2 + $0x8] sm:$0xf]
      %v625 = vlaneseq
      %v626 = vshrl.u32 %v625, 7
      %v627 = vsub.s32 0, %v626
      %v628 = vrot.slane %v621, %v627
      %v629 = vlaneseq
      %v630 = vshrl.u32 %v629, 7
      %v631 = vsub.s32 1, %v630
      %v632 = vrot.slane %v621, %v631
      %v633 = vcombine.low %v628, %v632
      %634 = vrot.lane.b32.xlu0 %v633, 57
      %v635 = vpop.permute.xlu0 %634
      %v636 = vrot.slane %v635, 4
      %vm637 = vcmask 465920
      %v638 = vsel %vm637, %v636, %v635
      %v641 = vmul.f32 %v622, %v638
      %v642 = vmul.f32 %v623, %v636
      %v645 = vcombine.high %v641, %v641
      %646 = vrot.lane.b32.xlu0 %v641, 71
      %v647 = vpop.permute.xlu0 %646
      %648 = vrot.lane.b32.xlu0 %v645, 71
      %v649 = vpop.permute.xlu0 %648
      %650 = vrot.lane.b32.xlu0 %v642, 71
      %v651 = vpop.permute.xlu0 %650
      %vm652 = vcmask 580608
      %v653 = vsel %vm652, %v647, %v649
      %v654 = vsel %vm652, %v649, %v651
      %657 = vst [vmem:[#allocation3 + $0x10] sm:$0xf] %v653
      %658 = vst [vmem:[#allocation3 + $0x18] sm:$0xf] %v654
      %v659 = vld [vmem:[#allocation2] sm:$0xff]
      %v660 = vld [vmem:[#allocation2 + $0x8] sm:$0xf]
      %661 = vrot.lane.b32.xlu0 %v633, 121
      %v662 = vpop.permute.xlu0 %661
      %v663 = vrot.slane %v662, 4
      %vm664 = vcmask 990208
      %v665 = vsel %vm664, %v663, %v662
      %v668 = vmul.f32 %v659, %v665
      %v669 = vmul.f32 %v660, %v663
      %v672 = vcombine.low %v668, %v668
      %v673 = vcombine.low %v669, %v669
      %674 = vrot.lane.b32.xlu0 %v672, 7
      %v675 = vpop.permute.xlu0 %674
      %676 = vrot.lane.b32.xlu0 %v668, 7
      %v677 = vpop.permute.xlu0 %676
      %678 = vrot.lane.b32.xlu0 %v673, 7
      %v679 = vpop.permute.xlu0 %678
      %vm680 = vcmask 56320
      %v681 = vsel %vm680, %v675, %v677
      %v682 = vsel %vm680, %v677, %v679
      %685 = vst [vmem:[#allocation3 + $0x50] sm:$0xf0] %v681
      %686 = vst [vmem:[#allocation3 + $0x58] sm:$0xf0] %v682
      %v687 = vld [vmem:[#allocation2 + $0x4] sm:$0xff]
      %v688 = vld [vmem:[#allocation2 + $0xc] sm:$0xf]
      %v689 = vmul.f32 %v687, %v638
      %v690 = vmul.f32 %v688, %v636
      %v693 = vcombine.high %v689, %v689
      %694 = vrot.lane.b32.xlu0 %v689, 71
      %v695 = vpop.permute.xlu0 %694
      %696 = vrot.lane.b32.xlu0 %v693, 71
      %v697 = vpop.permute.xlu0 %696
      %698 = vrot.lane.b32.xlu0 %v690, 71
      %v699 = vpop.permute.xlu0 %698
      %v700 = vsel %vm652, %v695, %v697
      %v701 = vsel %vm652, %v697, %v699
      %704 = vst [vmem:[#allocation3 + $0xa0] sm:$0xf] %v700
      %705 = vst [vmem:[#allocation3 + $0xa8] sm:$0xf] %v701
      %s706 = scalar_lea.vmem %s4, 3
      %v707 = vld [vmem:[%s706] ss:$8 sm:$0x3]
      %v708 = vld [vmem:[#allocation2] sm:$0xff]
      %v709 = vld [vmem:[#allocation2 + $0x8] sm:$0xf]
      %v711 = vlaneseq
      %v712 = vshrl.u32 %v711, 7
      %v713 = vsub.s32 0, %v712
      %v714 = vrot.slane %v707, %v713
      %v715 = vlaneseq
      %v716 = vshrl.u32 %v715, 7
      %v717 = vsub.s32 1, %v716
      %v718 = vrot.slane %v707, %v717
      %v719 = vcombine.low %v714, %v718
      %720 = vrot.lane.b32.xlu0 %v719, 63
      %v721 = vpop.permute.xlu0 %720
      %v722 = vrot.slane %v721, 4
      %vm723 = vcmask 515072
      %v724 = vsel %vm723, %v722, %v721
      %v727 = vmul.f32 %v708, %v724
      %v728 = vmul.f32 %v709, %v722
      %v731 = vcombine.low %v727, %v727
      %v732 = vcombine.low %v728, %v728
      %733 = vrot.lane.b32.xlu0 %v731, 65
      %v734 = vpop.permute.xlu0 %733
      %735 = vrot.lane.b32.xlu0 %v727, 65
      %v736 = vpop.permute.xlu0 %735
      %737 = vrot.lane.b32.xlu0 %v732, 65
      %v738 = vpop.permute.xlu0 %737
      %vm739 = vcmask 531456
      %v740 = vsel %vm739, %v734, %v736
      %v741 = vsel %vm739, %v736, %v738
      %744 = vst [vmem:[#allocation3 + $0x10] sm:$0xf0] %v740
      %745 = vst [vmem:[#allocation3 + $0x18] sm:$0xf0] %v741
      %v746 = vld [vmem:[#allocation2] sm:$0xff]
      %v747 = vld [vmem:[#allocation2 + $0x8] sm:$0xf]
      %748 = vrot.lane.b32.xlu0 %v719, 127
      %v749 = vpop.permute.xlu0 %748
      %v750 = vrot.slane %v749, 4
      %vm751 = vcmask 1039360
      %v752 = vsel %vm751, %v750, %v749
      %v755 = vmul.f32 %v746, %v752
      %v756 = vmul.f32 %v747, %v750
      %v759 = vcombine.high %v755, %v755
      %760 = vrot.lane.b32.xlu0 %v755, 1
      %v761 = vpop.permute.xlu0 %760
      %762 = vrot.lane.b32.xlu0 %v759, 1
      %v763 = vpop.permute.xlu0 %762
      %764 = vrot.lane.b32.xlu0 %v756, 1
      %v765 = vpop.permute.xlu0 %764
      %vm766 = vcmask 7168
      %v767 = vsel %vm766, %v761, %v763
      %v768 = vsel %vm766, %v763, %v765
      %771 = vst [vmem:[#allocation3 + $0x60] sm:$0xf] %v767
      %772 = vst [vmem:[#allocation3 + $0x68] sm:$0xf] %v768
      %v773 = vld [vmem:[#allocation2 + $0x4] sm:$0xff]
      %v774 = vld [vmem:[#allocation2 + $0xc] sm:$0xf]
      %v775 = vmul.f32 %v773, %v724
      %v776 = vmul.f32 %v774, %v722
      %v779 = vcombine.low %v775, %v775
      %v780 = vcombine.low %v776, %v776
      %781 = vrot.lane.b32.xlu0 %v779, 65
      %v782 = vpop.permute.xlu0 %781
      %783 = vrot.lane.b32.xlu0 %v775, 65
      %v784 = vpop.permute.xlu0 %783
      %785 = vrot.lane.b32.xlu0 %v780, 65
      %v786 = vpop.permute.xlu0 %785
      %v787 = vsel %vm739, %v782, %v784
      %v788 = vsel %vm739, %v784, %v786
      %791 = vst [vmem:[#allocation3 + $0xa0] sm:$0xf0] %v787
      %792 = vst [vmem:[#allocation3 + $0xa8] sm:$0xf0] %v788
      %v793 = vld [vmem:[#allocation2] sm:$0xff]
      %v794 = vld [vmem:[#allocation2 + $0x8] sm:$0xf]
      %v797 = vcombine.high %v793, %v793
      %798 = vrot.lane.b32.xlu0 %v793, 64
      %v799 = vpop.permute.xlu0 %798
      %800 = vrot.lane.b32.xlu0 %v797, 64
      %v801 = vpop.permute.xlu0 %800
      %802 = vrot.lane.b32.xlu0 %v794, 64
      %v803 = vpop.permute.xlu0 %802
      %vm804 = vcmask 523264
      %v805 = vsel %vm804, %v799, %v801
      %v806 = vsel %vm804, %v801, %v803
      %809 = vst [vmem:[#allocation3 + $0x20] sm:$0xf] %v805
      %810 = vst [vmem:[#allocation3 + $0x28] sm:$0xf] %v806
      %v811 = vld [vmem:[#allocation2 + $0x4] sm:$0xff]
      %v813 = vcombine.low %v811, %v811
      %815 = vst [vmem:[#allocation3 + $0x60] sm:$0xf0] %v813
      %816 = vst [vmem:[#allocation3 + $0x68] sm:$0xf0] %v811
      %v817 = vld [vmem:[#allocation2 + $0x4] sm:$0xff]
      %v818 = vld [vmem:[#allocation2 + $0xc] sm:$0xf]
      %v821 = vcombine.high %v817, %v817
      %822 = vrot.lane.b32.xlu0 %v817, 64
      %v823 = vpop.permute.xlu0 %822
      %824 = vrot.lane.b32.xlu0 %v821, 64
      %v825 = vpop.permute.xlu0 %824
      %826 = vrot.lane.b32.xlu0 %v818, 64
      %v827 = vpop.permute.xlu0 %826
      %v828 = vsel %vm804, %v823, %v825
      %v829 = vsel %vm804, %v825, %v827
      %832 = vst [vmem:[#allocation3 + $0xb0] sm:$0xf] %v828
      %833 = vst [vmem:[#allocation3 + $0xb8] sm:$0xf] %v829
      %s834 = scalar_lea.vmem %s4, 5
      %v835 = vld [vmem:[%s834] ss:$8 sm:$0x3]
      %v836 = vld [vmem:[#allocation2] sm:$0xff]
      %v837 = vld [vmem:[#allocation2 + $0x8] sm:$0xf]
      %v839 = vlaneseq
      %v840 = vshrl.u32 %v839, 7
      %v841 = vsub.s32 0, %v840
      %v842 = vrot.slane %v835, %v841
      %v843 = vlaneseq
      %v844 = vshrl.u32 %v843, 7
      %v845 = vsub.s32 1, %v844
      %v846 = vrot.slane %v835, %v845
      %v847 = vcombine.low %v842, %v846
      %848 = vrot.lane.b32.xlu0 %v847, 65
      %v849 = vpop.permute.xlu0 %848
      %v850 = vrot.slane %v849, 4
      %v851 = vsel %vm739, %v850, %v849
      %v854 = vmul.f32 %v836, %v851
      %v855 = vmul.f32 %v837, %v850
      %v858 = vcombine.low %v854, %v854
      %v859 = vcombine.low %v855, %v855
      %860 = vrot.lane.b32.xlu0 %v858, 63
      %v861 = vpop.permute.xlu0 %860
      %862 = vrot.lane.b32.xlu0 %v854, 63
      %v863 = vpop.permute.xlu0 %862
      %864 = vrot.lane.b32.xlu0 %v859, 63
      %v865 = vpop.permute.xlu0 %864
      %v866 = vsel %vm723, %v861, %v863
      %v867 = vsel %vm723, %v863, %v865
      %870 = vst [vmem:[#allocation3 + $0x20] sm:$0xf0] %v866
      %871 = vst [vmem:[#allocation3 + $0x28] sm:$0xf0] %v867
      %v872 = vld [vmem:[#allocation2 + $0x4] sm:$0xff]
      %v873 = vld [vmem:[#allocation2 + $0xc] sm:$0xf]
      %874 = vrot.lane.b32.xlu0 %v847, 1
      %v875 = vpop.permute.xlu0 %874
      %v876 = vrot.slane %v875, 4
      %v877 = vsel %vm766, %v876, %v875
      %v880 = vmul.f32 %v872, %v877
      %v881 = vmul.f32 %v873, %v876
      %v884 = vcombine.high %v880, %v880
      %885 = vrot.lane.b32.xlu0 %v880, 127
      %v886 = vpop.permute.xlu0 %885
      %887 = vrot.lane.b32.xlu0 %v884, 127
      %v888 = vpop.permute.xlu0 %887
      %889 = vrot.lane.b32.xlu0 %v881, 127
      %v890 = vpop.permute.xlu0 %889
      %v891 = vsel %vm751, %v886, %v888
      %v892 = vsel %vm751, %v888, %v890
      %895 = vst [vmem:[#allocation3 + $0x70] sm:$0xf] %v891
      %896 = vst [vmem:[#allocation3 + $0x78] sm:$0xf] %v892
      %v897 = vld [vmem:[#allocation2 + $0x4] sm:$0xff]
      %v898 = vld [vmem:[#allocation2 + $0xc] sm:$0xf]
      %v899 = vmul.f32 %v897, %v851
      %v900 = vmul.f32 %v898, %v850
      %v903 = vcombine.low %v899, %v899
      %v904 = vcombine.low %v900, %v900
      %905 = vrot.lane.b32.xlu0 %v903, 63
      %v906 = vpop.permute.xlu0 %905
      %907 = vrot.lane.b32.xlu0 %v899, 63
      %v908 = vpop.permute.xlu0 %907
      %909 = vrot.lane.b32.xlu0 %v904, 63
      %v910 = vpop.permute.xlu0 %909
      %v911 = vsel %vm723, %v906, %v908
      %v912 = vsel %vm723, %v908, %v910
      %915 = vst [vmem:[#allocation3 + $0xb0] sm:$0xf0] %v911
      %916 = vst [vmem:[#allocation3 + $0xb8] sm:$0xf0] %v912
      %s917 = scalar_lea.vmem %s4, 6
      %v918 = vld [vmem:[%s917] ss:$8 sm:$0x3]
      %v919 = vld [vmem:[#allocation2] sm:$0xff]
      %v920 = vld [vmem:[#allocation2 + $0x8] sm:$0xf]
      %v922 = vlaneseq
      %v923 = vshrl.u32 %v922, 7
      %v924 = vsub.s32 0, %v923
      %v925 = vrot.slane %v918, %v924
      %v926 = vlaneseq
      %v927 = vshrl.u32 %v926, 7
      %v928 = vsub.s32 1, %v927
      %v929 = vrot.slane %v918, %v928
      %v930 = vcombine.low %v925, %v929
      %931 = vrot.lane.b32.xlu0 %v930, 71
      %v932 = vpop.permute.xlu0 %931
      %v933 = vrot.slane %v932, 4
      %v934 = vsel %vm652, %v933, %v932
      %v937 = vmul.f32 %v919, %v934
      %v938 = vmul.f32 %v920, %v933
      %v941 = vcombine.high %v937, %v937
      %942 = vrot.lane.b32.xlu0 %v937, 57
      %v943 = vpop.permute.xlu0 %942
      %944 = vrot.lane.b32.xlu0 %v941, 57
      %v945 = vpop.permute.xlu0 %944
      %946 = vrot.lane.b32.xlu0 %v938, 57
      %v947 = vpop.permute.xlu0 %946
      %v948 = vsel %vm637, %v943, %v945
      %v949 = vsel %vm637, %v945, %v947
      %952 = vst [vmem:[#allocation3 + $0x30] sm:$0xf] %v948
      %953 = vst [vmem:[#allocation3 + $0x38] sm:$0xf] %v949
      %v954 = vld [vmem:[#allocation2 + $0x4] sm:$0xff]
      %v955 = vld [vmem:[#allocation2 + $0xc] sm:$0xf]
      %956 = vrot.lane.b32.xlu0 %v930, 7
      %v957 = vpop.permute.xlu0 %956
      %v958 = vrot.slane %v957, 4
      %v959 = vsel %vm680, %v958, %v957
      %v962 = vmul.f32 %v954, %v959
      %v963 = vmul.f32 %v955, %v958
      %v966 = vcombine.low %v962, %v962
      %v967 = vcombine.low %v963, %v963
      %968 = vrot.lane.b32.xlu0 %v966, 121
      %v969 = vpop.permute.xlu0 %968
      %970 = vrot.lane.b32.xlu0 %v962, 121
      %v971 = vpop.permute.xlu0 %970
      %972 = vrot.lane.b32.xlu0 %v967, 121
      %v973 = vpop.permute.xlu0 %972
      %v974 = vsel %vm664, %v969, %v971
      %v975 = vsel %vm664, %v971, %v973
      %978 = vst [vmem:[#allocation3 + $0x70] sm:$0xf0] %v974
      %979 = vst [vmem:[#allocation3 + $0x78] sm:$0xf0] %v975
      %v980 = vld [vmem:[#allocation2 + $0x4] sm:$0xff]
      %v981 = vld [vmem:[#allocation2 + $0xc] sm:$0xf]
      %v982 = vmul.f32 %v980, %v934
      %v983 = vmul.f32 %v981, %v933
      %v986 = vcombine.high %v982, %v982
      %987 = vrot.lane.b32.xlu0 %v982, 57
      %v988 = vpop.permute.xlu0 %987
      %989 = vrot.lane.b32.xlu0 %v986, 57
      %v990 = vpop.permute.xlu0 %989
      %991 = vrot.lane.b32.xlu0 %v983, 57
      %v992 = vpop.permute.xlu0 %991
      %v993 = vsel %vm637, %v988, %v990
      %v994 = vsel %vm637, %v990, %v992
      %997 = vst [vmem:[#allocation3 + $0xc0] sm:$0xf] %v993
      %998 = vst [vmem:[#allocation3 + $0xc8] sm:$0xf] %v994
      %s999 = scalar_lea.vmem %s4, 7
      %v1000 = vld [vmem:[%s999] ss:$8 sm:$0x3]
      %v1001 = vld [vmem:[#allocation2] sm:$0xff]
      %v1002 = vld [vmem:[#allocation2 + $0x8] sm:$0xf]
      %v1004 = vlaneseq
      %v1005 = vshrl.u32 %v1004, 7
      %v1006 = vsub.s32 0, %v1005
      %v1007 = vrot.slane %v1000, %v1006
      %v1008 = vlaneseq
      %v1009 = vshrl.u32 %v1008, 7
      %v1010 = vsub.s32 1, %v1009
      %v1011 = vrot.slane %v1000, %v1010
      %v1012 = vcombine.low %v1007, %v1011
      %1013 = vrot.lane.b32.xlu0 %v1012, 72
      %v1014 = vpop.permute.xlu0 %1013
      %v1015 = vrot.slane %v1014, 4
      %v1016 = vsel %vm566, %v1015, %v1014
      %v1019 = vmul.f32 %v1001, %v1016
      %v1020 = vmul.f32 %v1002, %v1015
      %v1023 = vcombine.low %v1019, %v1019
      %v1024 = vcombine.low %v1020, %v1020
      %1025 = vrot.lane.b32.xlu0 %v1023, 56
      %v1026 = vpop.permute.xlu0 %1025
      %1027 = vrot.lane.b32.xlu0 %v1019, 56
      %v1028 = vpop.permute.xlu0 %1027
      %1029 = vrot.lane.b32.xlu0 %v1024, 56
      %v1030 = vpop.permute.xlu0 %1029
      %v1031 = vsel %vm550, %v1026, %v1028
      %v1032 = vsel %vm550, %v1028, %v1030
      %1035 = vst [vmem:[#allocation3 + $0x30] sm:$0xf0] %v1031
      %1036 = vst [vmem:[#allocation3 + $0x38] sm:$0xf0] %v1032
      %v1037 = vld [vmem:[#allocation2 + $0x4] sm:$0xff]
      %v1038 = vld [vmem:[#allocation2 + $0xc] sm:$0xf]
      %1039 = vrot.lane.b32.xlu0 %v1012, 8
      %v1040 = vpop.permute.xlu0 %1039
      %v1041 = vrot.slane %v1040, 4
      %v1042 = vsel %vm593, %v1041, %v1040
      %v1045 = vmul.f32 %v1037, %v1042
      %v1046 = vmul.f32 %v1038, %v1041
      %v1049 = vcombine.high %v1045, %v1045
      %1050 = vrot.lane.b32.xlu0 %v1045, 120
      %v1051 = vpop.permute.xlu0 %1050
      %1052 = vrot.lane.b32.xlu0 %v1049, 120
      %v1053 = vpop.permute.xlu0 %1052
      %1054 = vrot.lane.b32.xlu0 %v1046, 120
      %v1055 = vpop.permute.xlu0 %1054
      %v1056 = vsel %vm578, %v1051, %v1053
      %v1057 = vsel %vm578, %v1053, %v1055
      %1060 = vst [vmem:[#allocation3 + $0x80] sm:$0xf] %v1056
      %1061 = vst [vmem:[#allocation3 + $0x88] sm:$0xf] %v1057
      %v1062 = vld [vmem:[#allocation2 + $0x4] sm:$0xff]
      %v1063 = vld [vmem:[#allocation2 + $0xc] sm:$0xf]
      %v1064 = vmul.f32 %v1062, %v1016
      %v1065 = vmul.f32 %v1063, %v1015
      %v1068 = vcombine.low %v1064, %v1064
      %v1069 = vcombine.low %v1065, %v1065
      %1070 = vrot.lane.b32.xlu0 %v1068, 56
      %v1071 = vpop.permute.xlu0 %1070
      %1072 = vrot.lane.b32.xlu0 %v1064, 56
      %v1073 = vpop.permute.xlu0 %1072
      %1074 = vrot.lane.b32.xlu0 %v1069, 56
      %v1075 = vpop.permute.xlu0 %1074
      %v1076 = vsel %vm550, %v1071, %v1073
      %v1077 = vsel %vm550, %v1073, %v1075
      %1080 = vst [vmem:[#allocation3 + $0xc0] sm:$0xf0] %v1076
      %1081 = vst [vmem:[#allocation3 + $0xc8] sm:$0xf0] %v1077
      %s1082 = scalar_lea.vmem %s4, 16
      %v1083 = vld [vmem:[%s1082] ss:$8 sm:$0x3]
      %v1084 = vld [vmem:[#allocation2] sm:$0xff]
      %v1085 = vld [vmem:[#allocation2 + $0x8] sm:$0xf]
      %v1087 = vlaneseq
      %v1088 = vshrl.u32 %v1087, 7
      %v1089 = vsub.s32 0, %v1088
      %v1090 = vrot.slane %v1083, %v1089
      %v1091 = vlaneseq
      %v1092 = vshrl.u32 %v1091, 7
      %v1093 = vsub.s32 1, %v1092
      %v1094 = vrot.slane %v1083, %v1093
      %v1095 = vcombine.low %v1090, %v1094
      %1096 = vrot.lane.b32.xlu0 %v1095, 73
      %v1097 = vpop.permute.xlu0 %1096
      %v1098 = vrot.slane %v1097, 4
      %v1099 = vsel %vm479, %v1098, %v1097
      %v1102 = vmul.f32 %v1084, %v1099
      %v1103 = vmul.f32 %v1085, %v1098
      %v1106 = vcombine.high %v1102, %v1102
      %1107 = vrot.lane.b32.xlu0 %v1102, 55
      %v1108 = vpop.permute.xlu0 %1107
      %1109 = vrot.lane.b32.xlu0 %v1106, 55
      %v1110 = vpop.permute.xlu0 %1109
      %1111 = vrot.lane.b32.xlu0 %v1103, 55
      %v1112 = vpop.permute.xlu0 %1111
      %v1113 = vsel %vm464, %v1108, %v1110
      %v1114 = vsel %vm464, %v1110, %v1112
      %1117 = vst [vmem:[#allocation3 + $0x40] sm:$0xf] %v1113
      %1118 = vst [vmem:[#allocation3 + $0x48] sm:$0xf] %v1114
      %v1119 = vld [vmem:[#allocation2 + $0x4] sm:$0xff]
      %v1120 = vld [vmem:[#allocation2 + $0xc] sm:$0xf]
      %1121 = vrot.lane.b32.xlu0 %v1095, 9
      %v1122 = vpop.permute.xlu0 %1121
      %v1123 = vrot.slane %v1122, 4
      %v1124 = vsel %vm507, %v1123, %v1122
      %v1127 = vmul.f32 %v1119, %v1124
      %v1128 = vmul.f32 %v1120, %v1123
      %v1131 = vcombine.low %v1127, %v1127
      %v1132 = vcombine.low %v1128, %v1128
      %1133 = vrot.lane.b32.xlu0 %v1131, 119
      %v1134 = vpop.permute.xlu0 %1133
      %1135 = vrot.lane.b32.xlu0 %v1127, 119
      %v1136 = vpop.permute.xlu0 %1135
      %1137 = vrot.lane.b32.xlu0 %v1132, 119
      %v1138 = vpop.permute.xlu0 %1137
      %v1139 = vsel %vm491, %v1134, %v1136
      %v1140 = vsel %vm491, %v1136, %v1138
      %1143 = vst [vmem:[#allocation3 + $0x80] sm:$0xf0] %v1139
      %1144 = vst [vmem:[#allocation3 + $0x88] sm:$0xf0] %v1140
      %v1145 = vld [vmem:[#allocation2 + $0x4] sm:$0xff]
      %v1146 = vld [vmem:[#allocation2 + $0xc] sm:$0xf]
      %v1147 = vmul.f32 %v1145, %v1099
      %v1148 = vmul.f32 %v1146, %v1098
      %v1151 = vcombine.high %v1147, %v1147
      %1152 = vrot.lane.b32.xlu0 %v1147, 55
      %v1153 = vpop.permute.xlu0 %1152
      %1154 = vrot.lane.b32.xlu0 %v1151, 55
      %v1155 = vpop.permute.xlu0 %1154
      %1156 = vrot.lane.b32.xlu0 %v1148, 55
      %v1157 = vpop.permute.xlu0 %1156
      %v1158 = vsel %vm464, %v1153, %v1155
      %v1159 = vsel %vm464, %v1155, %v1157
      %1162 = vst [vmem:[#allocation3 + $0xd0] sm:$0xf] %v1158
      %1163 = vst [vmem:[#allocation3 + $0xd8] sm:$0xf] %v1159
      %v1164 = vld [vmem:[%s3] sm:$0xff]
      %v1165 = vld [vmem:[#allocation3] sm:$0xff]
      %v1166 = vld [vmem:[#allocation3 + $0x8] sm:$0xff]
      %v1167 = vld [vmem:[#allocation3 + $0x10] sm:$0xff]
      %v1168 = vld [vmem:[#allocation3 + $0x18] sm:$0xff]
      %v1169 = vld [vmem:[#allocation3 + $0x20] sm:$0xff]
      %v1170 = vld [vmem:[#allocation3 + $0x28] sm:$0xff]
      %v1171 = vld [vmem:[#allocation3 + $0x30] sm:$0xff]
      %v1172 = vld [vmem:[#allocation3 + $0x38] sm:$0xff]
      %v1173 = vld [vmem:[#allocation3 + $0x40] sm:$0xff]
      %v1174 = vld [vmem:[#allocation3 + $0x48] sm:$0xff]
      %v1175 = vld [vmem:[#allocation3 + $0x50] sm:$0xff]
      %v1176 = vld [vmem:[#allocation3 + $0x58] sm:$0xff]
      %v1177 = vld [vmem:[#allocation3 + $0x60] sm:$0xff]
      %v1178 = vld [vmem:[#allocation3 + $0x68] sm:$0xff]
      %v1179 = vld [vmem:[#allocation3 + $0x70] sm:$0xff]
      %v1180 = vld [vmem:[#allocation3 + $0x78] sm:$0xff]
      %v1181 = vld [vmem:[#allocation3 + $0x80] sm:$0xff]
      %v1182 = vld [vmem:[#allocation3 + $0x88] sm:$0xff]
      %v1183 = vld [vmem:[#allocation3 + $0x90] sm:$0xff]
      %v1184 = vld [vmem:[#allocation3 + $0x98] sm:$0xff]
      %v1185 = vld [vmem:[#allocation3 + $0xa0] sm:$0xff]
      %v1186 = vld [vmem:[#allocation3 + $0xa8] sm:$0xff]
      %v1187 = vld [vmem:[#allocation3 + $0xb0] sm:$0xff]
      %v1188 = vld [vmem:[#allocation3 + $0xb8] sm:$0xff]
      %v1189 = vld [vmem:[#allocation3 + $0xc0] sm:$0xff]
      %v1190 = vld [vmem:[#allocation3 + $0xc8] sm:$0xff]
      %v1191 = vld [vmem:[#allocation3 + $0xd0] sm:$0xf]
      %v1192 = vld [vmem:[#allocation3 + $0xd8] sm:$0xf]
      %vm1193 = vcmask 883712
      %v1195 = vsel %vm1193, %v1164, 0
      %vm1197 = vcmask 1043456
      %v1199 = vsel %vm1197, %v1191, 0
      %v1202 = vsel %vm1197, %v1192, 0
      %1204 = vmatprep.subr.mxu0 %v1166
      %1205 = vmatpush1.msra.mxu0 %v1165
      %1206 = vmatprep.subr.mxu0 %v1168
      %1207 = vmatpush1.msra.mxu0 %v1167
      %1208 = vmatprep.subr.mxu0 %v1170
      %1209 = vmatpush1.msra.mxu0 %v1169
      %1210 = vmatprep.subr.mxu0 %v1172
      %1211 = vmatpush1.msra.mxu0 %v1171
      %1212 = vmatprep.subr.mxu0 %v1174
      %1213 = vmatpush1.msra.mxu0 %v1173
      %1214 = vmatprep.subr.mxu0 %v1176
      %1215 = vmatpush1.msra.mxu0 %v1175
      %1216 = vmatprep.subr.mxu0 %v1178
      %1217 = vmatpush1.msra.mxu0 %v1177
      %1218 = vmatprep.subr.mxu0 %v1180
      %1219 = vmatpush1.msra.mxu0 %v1179
      %1220 = vmatprep.subr.mxu0 %v1182
      %1221 = vmatpush1.msra.mxu0 %v1181
      %1222 = vmatprep.subr.mxu0 %v1184
      %1223 = vmatpush1.msra.mxu0 %v1183
      %1224 = vmatprep.subr.mxu0 %v1186
      %1225 = vmatpush1.msra.mxu0 %v1185
      %1226 = vmatprep.subr.mxu0 %v1188
      %1227 = vmatpush1.msra.mxu0 %v1187
      %1228 = vmatprep.subr.mxu0 %v1190
      %1229 = vmatpush1.msra.mxu0 %v1189
      %1230 = vmatprep.subr.mxu0 %v1202
      %1231 = vmatpush1.msra.mxu0 %v1199
      %1232 = vmatprep.subr.mxu0 0.0
      %1233 = vmatpush1.msra.mxu0 0.0
      %1234 = vmatprep.subr.mxu0 0.0
      %1235 = vmatpush1.msra.mxu0 0.0
      %1236 = vmatprep.subr.mxu0 0.0
      %1237 = vmatpush1.msra.mxu0 0.0
      %1238 = vmatprep.subr.mxu0 0.0
      %1239 = vmatpush1.msra.mxu0 0.0
      %1240 = vmatprep.subr.mxu0 0.0
      %1241 = vmatpush1.msra.mxu0 0.0
      %1242 = vmatprep.subr.mxu0 0.0
      %1243 = vmatpush1.msra.mxu0 0.0
      %1244 = vmatprep.subr.mxu0 0.0
      %1245 = vmatpush1.msra.mxu0 0.0
      %1246 = vmatprep.subr.mxu0 0.0
      %1247 = vmatpush1.msra.mxu0 0.0
      %1248 = vmatprep.subr.mxu0 0.0
      %1249 = vmatpush1.msra.mxu0 0.0
      %1250 = vmatprep.subr.mxu0 0.0
      %1251 = vmatpush1.msra.mxu0 0.0
      %1252 = vmatprep.subr.mxu0 0.0
      %1253 = vmatpush1.msra.mxu0 0.0
      %1254 = vmatprep.subr.mxu0 0.0
      %1255 = vmatpush1.msra.mxu0 0.0
      %1256 = vmatprep.subr.mxu0 0.0
      %1257 = vmatpush1.msra.mxu0 0.0
      %1258 = vmatprep.subr.mxu0 0.0
      %1259 = vmatpush1.msra.mxu0 0.0
      %1260 = vmatprep.subr.mxu0 0.0
      %1261 = vmatpush1.msra.mxu0 0.0
      %1262 = vmatprep.subr.mxu0 0.0
      %1263 = vmatpush1.msra.mxu0 0.0
      %1264 = vmatprep.subr.mxu0 0.0
      %1265 = vmatpush1.msra.mxu0 0.0
      %1266 = vmatprep.subr.mxu0 0.0
      %1267 = vmatpush1.msra.mxu0 0.0
      %1268 = vmatprep.mubr.f32.mxu0 0.0
      %1269 = vmatmul.mubr.f32.gmra.mrb[0].mxu0 %v1195
      %v1270 = vpop.f32.mrb[0].mxu0
      %v1271 = vadd.f32 0.0, %v1270
      %v1272 = vpop.f32.mrb[0].mxu0
      %v1273 = vadd.f32 0.0, %v1272
      %1274 = vdwg.mxu0
      %1275 = vst [vmem:[%s420] sm:$0xff] %v1271
      %1276 = vst [vmem:[%s420 + $0x8] sm:$0xff] %v1273
      %v1277 = vadd.f32 %v1271, %v1273
      %1278 = vadd.xlane.f32.xlu0 %v1277
      %v1279 = vpop.xlane.xlu0 %1278
      %v1280 = vmul.f32 %v1279, 0.00390625
      %v1281 = vsub.f32 %v1271, %v1280
      %v1282 = vsub.f32 %v1273, %v1280
      %v1283 = vmul.f32 %v1281, %v1281
      %v1284 = vmul.f32 %v1282, %v1282
      %v1285 = vadd.f32 %v1283, %v1284
      %1286 = vadd.xlane.f32.xlu0 %v1285
      %v1287 = vpop.xlane.xlu0 %1286
      %1288 = vst.msk [vmem:[%s429] sm:$0xff] %vm766, %v1279
      %vm1289 = vcmask 15368
      %1290 = vst.msk [vmem:[%s429] sm:$0xff] %vm1289, %v1287
      %s1291 = smul.u32 2, %s23
      %p1292 = scmp.lt.s32.totalorder %s22, 1
      %s1293 = scalar_select %p1292, %s22, 1
      %p1294 = scmp.lt.s32.totalorder %s1291, 3
      %s1295 = scalar_select %p1294, %s1291, 3
      %s1296 = smul.addr %s1293, 4
      %s1297 = sadd.s32 %s1295, %s1296
      %s1298 = smul.addr %s1297, 8
      %s1299 = scalar_lea.vmem %s5, %s1298
      %p1300 = scmp.lt.s32.totalorder %s22, 1
      %s1301 = scalar_select %p1300, %s22, 1
      %p1302 = scmp.lt.s32.totalorder %s23, 1
      %s1303 = scalar_select %p1302, %s23, 1
      %s1304 = smul.addr %s1301, 2
      %s1305 = sadd.s32 %s1303, %s1304
      %s1306 = smul.addr %s1305, 8
      %s1307 = scalar_lea.vmem %s6, %s1306
      // Predicated region
      $region49: #{conv3d3x3_block.2} parent=39 // pred_check
        %p1308 = pneg %p192
      $region50: #{conv3d3x3_block.2} parent=39 // pred_check_branch
        %1310 = sbr.rel (%p1308) target = $region52
      $region51: #{conv3d3x3_block.2} parent=39 // pred_region
        %s1311 = smul.u32 2, %s23
      $region52: #{conv3d3x3_block.2} parent=39 // pred_fallthru
        _
      // Predicated region
      $region53: #{conv3d3x3_block.2} parent=39 // pred_check
        %p1312 = pneg %p220
      $region54: #{conv3d3x3_block.2} parent=39 // pred_check_branch
        %1314 = sbr.rel (%p1312) target = $region56
      $region55: #{conv3d3x3_block.2} parent=39 // pred_region
        _
      $region56: #{conv3d3x3_block.2} parent=39 // pred_fallthru
        _
    $region40: #{conv3d3x3_block.2} parent=5 // pred_fallthru
      _
    %p1315 = scmp.le.s32.totalorder 2, %s13
    // Predicated region
    $region57: #{conv3d3x3_block.2} parent=5 // pred_check
      %p1316 = pneg %p1315
    $region58: #{conv3d3x3_block.2} parent=5 // pred_check_branch
      %1318 = sbr.rel (%p1316) target = $region60
    $region59: #{conv3d3x3_block.2} parent=5 // pred_region
      %s1319 = ssub.s32 %s13, 2
      // Predicated region
      $region61: #{conv3d3x3_block.2} parent=59 // pred_check
        %p1320 = pneg %p198
      $region62: #{conv3d3x3_block.2} parent=59 // pred_check_branch
        %1322 = sbr.rel (%p1320) target = $region64
      $region63: #{conv3d3x3_block.2} parent=59 // pred_region
        %s1323 = smul.u32 2, %s25
        %p1324 = scmp.lt.s32.totalorder %s24, 1
        %s1325 = scalar_select %p1324, %s24, 1
        %p1326 = scmp.lt.s32.totalorder %s1323, 3
        %s1327 = scalar_select %p1326, %s1323, 3
        %s1328 = smul.addr %s1325, 4
        %s1329 = sadd.s32 %s1327, %s1328
        %s1330 = smul.addr %s1329, 8
        %s1331 = scalar_lea.vmem %s5, %s1330
      $region64: #{conv3d3x3_block.2} parent=59 // pred_fallthru
        _
      // Predicated region
      $region65: #{conv3d3x3_block.2} parent=59 // pred_check
        %p1332 = pneg %p226
      $region66: #{conv3d3x3_block.2} parent=59 // pred_check_branch
        %1334 = sbr.rel (%p1332) target = $region68
      $region67: #{conv3d3x3_block.2} parent=59 // pred_region
        %p1335 = scmp.lt.s32.totalorder %s24, 1
        %s1336 = scalar_select %p1335, %s24, 1
        %p1337 = scmp.lt.s32.totalorder %s25, 1
        %s1338 = scalar_select %p1337, %s25, 1
        %s1339 = smul.addr %s1336, 2
        %s1340 = sadd.s32 %s1338, %s1339
        %s1341 = smul.addr %s1340, 8
        %s1342 = scalar_lea.vmem %s6, %s1341
      $region68: #{conv3d3x3_block.2} parent=59 // pred_fallthru
        _
    $region60: #{conv3d3x3_block.2} parent=5 // pred_fallthru
      _
  $region6: #{conv3d3x3_block.2} parent=0 // loop_footer
    %s17 = sadd.s32 1, %s13
  $region7: #{conv3d3x3_block.2} parent=0 // loop_footer_branch
    %12 = sbr.rel target = $region3
  $region8: #{conv3d3x3_block.2} parent=0 // loop_exit
    _

</llo_original>
